<compile_context>
chip_gen: v7x
topology: tpu7x:2x2x1
jax: 0.10.0
libtpu: 0.0.40
codegen_flags: <defaults>
</compile_context>

<pallas_src>
import functools

import numpy as np
import jax
import jax.numpy as jnp
from jax import lax
from jax.experimental import pallas as pl
from jax.experimental.pallas import tpu as pltpu


# ----------------------------- In-kernel helpers --------------------------- #

def _conv3x3_taps(x_cm, w_ref, m_ref, *, W, M):
    """3x3 'SAME' conv in transposed layout via 9 tap-wise MXU accumulations.

    x_cm : (Cin, M) f32 value, M = H*W flattened row-major.
    w_ref: (9, Cout, Cin) ref, tap k = ky*3 + kx  (HWIO weights re-packed).
    m_ref: (9, 1, M) f32 ref of per-tap validity masks (1.0 interior, 0.0 halo).
    Returns (Cout, M) f32.
    """
    acc = None
    for ky in range(3):
        for kx in range(3):
            k = ky * 3 + kx
            s = (ky - 1) * W + (kx - 1)          # flattened shift for this tap
            if s == 0:                           # centre tap: no shift, no halo
                xt = x_cm
            else:
                # want xt[m] = x[m + s]; lanes that wrap across image rows/edges
                # are exactly the mask==0 positions, so the wraparound is benign.
                xt = pltpu.roll(x_cm, shift=(-s) % M, axis=1)
                xt = xt * m_ref[k]
            c = lax.dot_general(
                w_ref[k], xt,
                dimension_numbers=(((1,), (0,)), ((), ())),
                preferred_element_type=jnp.float32)          # (Cout, M)
            acc = c if acc is None else acc + c
    return acc


def _sigmoid_eup(z):
    # tanh form: single EUP op, numerically safe, keeps the divide off the VPU.
    return 0.5 * jnp.tanh(0.5 * z) + 0.5


# ------------------------------- Pallas kernels ----------------------------- #

def _fused_head_kernel(x_ref, m_ref, w1_ref, b1_ref, w2_ref, b2_ref, o_ref, *, W):
    """Conv3x3+ReLU -> Conv3x3+Sigmoid for one batch element, all in VMEM."""
    M = x_ref.shape[-1]
    h = _conv3x3_taps(x_ref[...], w1_ref, m_ref, W=W, M=M)        # (C1, M) f32
    h = jnp.maximum(h + b1_ref[...], 0.0)                         # ReLU (kept f32)
    z = _conv3x3_taps(h, w2_ref, m_ref, W=W, M=M) + b2_ref[...]   # (C2p, M)
    o_ref[...] = _sigmoid_eup(z).astype(o_ref.dtype)


def _single_head_kernel(x_ref, m_ref, w_ref, b_ref, o_ref, *, W):
    """head_conv_channel == 0 case: single Conv3x3 + Sigmoid."""
    M = x_ref.shape[-1]
    z = _conv3x3_taps(x_ref[...], w_ref, m_ref, W=W, M=M) + b_ref[...]
    o_ref[...] = _sigmoid_eup(z).astype(o_ref.dtype)


# -------------------------------- Wrapper ----------------------------------- #

def _tap_masks(h, w):
    """(9, 1, H*W) f32 validity masks (host-side constant, computed once)."""
    yy, xx = np.meshgrid(np.arange(h), np.arange(w), indexing="ij")
    yy = yy.reshape(-1)
    xx = xx.reshape(-1)
    masks = []
    for ky in range(3):
        for kx in range(3):
            dy, dx = ky - 1, kx - 1
            valid = ((yy + dy >= 0) & (yy + dy < h) &
                     (xx + dx >= 0) & (xx + dx < w))
            masks.append(valid.astype(np.float32))
    return jnp.asarray(np.stack(masks).reshape(9, 1, h * w))


def _tap_weights(w_hwio):
    """HWIO (3,3,Cin,Cout) -> (9, Cout, Cin) per-tap weight slabs, f32."""
    kh, kw, cin, cout = w_hwio.shape
    return jnp.transpose(w_hwio.reshape(kh * kw, cin, cout),
                         (0, 2, 1)).astype(jnp.float32)


def _choose_vmem_limit(per_step_floats):
    """Raise the scoped-VMEM limit above 32 MiB only when the working set needs it."""
    need_bytes = 4 * per_step_floats
    lim = 32 * 1024 * 1024
    if 3 * need_bytes > lim:                       # blocks (double-buffered) + temps
        lim = min(3 * need_bytes, 64 * 1024 * 1024)  # stay <= v7x physical VMEM
    return lim


def common_head_with_sigmoid(x_nchw, params):
    """Forward pass matching the PyTorch module. Input/output are NCHW, f32."""
    n, cin, h, w = x_nchw.shape
    m = h * w

    # Metadata-only reshape: the kernel reads the original NCHW tensor directly.
    x2d = x_nchw.reshape(n, cin, m).astype(jnp.float32)
    masks = _tap_masks(h, w)

    c2 = params["w2"].shape[-1]
    c2p = ((c2 + 7) // 8) * 8                       # pad Cout to full sublanes

    if "w1" in params:
        c1 = params["w1"].shape[-1]
        w1_taps = _tap_weights(params["w1"])                       # (9, C1, Cin)
        b1_2d = params["b1"].reshape(c1, 1).astype(jnp.float32)
        w2_taps = _tap_weights(params["w2"])                       # (9, C2, C1)
        b2_2d = params["b2"].reshape(c2, 1).astype(jnp.float32)
        if c2p != c2:
            w2_taps = jnp.pad(w2_taps, ((0, 0), (0, c2p - c2), (0, 0)))
            b2_2d = jnp.pad(b2_2d, ((0, c2p - c2), (0, 0)))

        per_step = m * (cin + c1 + c2p + 9) + 9 * (c1 * cin + c2p * c1)
        cparams = pltpu.CompilerParams(
            dimension_semantics=("parallel",),
            vmem_limit_bytes=_choose_vmem_limit(per_step),
        )

        out = pl.pallas_call(
            functools.partial(_fused_head_kernel, W=w),
            out_shape=jax.ShapeDtypeStruct((n, c2p, m), jnp.float32),
            grid_spec=pltpu.PrefetchScalarGridSpec(
                num_scalar_prefetch=0,
                grid=(n,),
                in_specs=[
                    pl.BlockSpec((pl.Squeezed(), cin, m), lambda i: (i, 0, 0)),
                    pl.BlockSpec((9, 1, m), lambda i: (0, 0, 0)),
                    pl.BlockSpec((9, c1, cin), lambda i: (0, 0, 0)),
                    pl.BlockSpec((c1, 1), lambda i: (0, 0)),
                    pl.BlockSpec((9, c2p, c1), lambda i: (0, 0, 0)),
                    pl.BlockSpec((c2p, 1), lambda i: (0, 0)),
                ],
                out_specs=pl.BlockSpec((pl.Squeezed(), c2p, m),
                                       lambda i: (i, 0, 0)),
            ),
            compiler_params=cparams,
        )(x2d, masks, w1_taps, b1_2d, w2_taps, b2_2d)
    else:
        w2_taps = _tap_weights(params["w2"])                       # (9, C2, Cin)
        b2_2d = params["b2"].reshape(c2, 1).astype(jnp.float32)
        if c2p != c2:
            w2_taps = jnp.pad(w2_taps, ((0, 0), (0, c2p - c2), (0, 0)))
            b2_2d = jnp.pad(b2_2d, ((0, c2p - c2), (0, 0)))

        per_step = m * (cin + c2p + 9) + 9 * c2p * cin
        cparams = pltpu.CompilerParams(
            dimension_semantics=("parallel",),
            vmem_limit_bytes=_choose_vmem_limit(per_step),
        )

        out = pl.pallas_call(
            functools.partial(_single_head_kernel, W=w),
            out_shape=jax.ShapeDtypeStruct((n, c2p, m), jnp.float32),
            grid_spec=pltpu.PrefetchScalarGridSpec(
                num_scalar_prefetch=0,
                grid=(n,),
                in_specs=[
                    pl.BlockSpec((pl.Squeezed(), cin, m), lambda i: (i, 0, 0)),
                    pl.BlockSpec((9, 1, m), lambda i: (0, 0, 0)),
                    pl.BlockSpec((9, c2p, cin), lambda i: (0, 0, 0)),
                    pl.BlockSpec((c2p, 1), lambda i: (0, 0)),
                ],
                out_specs=pl.BlockSpec((pl.Squeezed(), c2p, m),
                                       lambda i: (i, 0, 0)),
            ),
            compiler_params=cparams,
        )(x2d, masks, w2_taps, b2_2d)

    if c2p != c2:
        out = out[:, :c2, :]
    # (N, Cout, H*W) is NCHW up to a free metadata reshape.
    return out.reshape(n, c2, h, w)


# --------------------------- Module equivalent ----------------------------- #

def init_common_head_params(key, class_num, in_channel, head_conv_channel):
    """Deterministic synthetic init (the module's external `init(m)` is not replicated)."""
    params = {}
    if head_conv_channel > 0:
        k1, k2 = jax.random.split(key)
        params["w1"] = 0.05 * jax.random.normal(
            k1, (3, 3, in_channel, head_conv_channel), jnp.float32)   # HWIO
        params["b1"] = jnp.full((head_conv_channel,), 0.01, jnp.float32)
        params["w2"] = 0.05 * jax.random.normal(
            k2, (3, 3, head_conv_channel, class_num), jnp.float32)
        params["b2"] = jnp.full((class_num,), 0.01, jnp.float32)
    else:
        params["w2"] = 0.05 * jax.random.normal(
            key, (3, 3, in_channel, class_num), jnp.float32)
        params["b2"] = jnp.full((class_num,), 0.01, jnp.float32)
    return params


# ------------------------------ Pure-JAX ref ------------------------------- #

def _ref_conv(x_nhwc, w_hwio, b):
    y = lax.conv_general_dilated(
        x_nhwc, w_hwio, window_strides=(1, 1), padding="SAME",
        dimension_numbers=("NHWC", "HWIO", "NHWC"),
        precision=lax.Precision.HIGHEST)
    return y + b.reshape(1, 1, 1, -1)


def ref_forward(x_nchw, params):
    x = jnp.transpose(x_nchw, (0, 2, 3, 1))
    if "w1" in params:
        x = jnp.maximum(_ref_conv(x, params["w1"], params["b1"]), 0.0)
    x = jax.nn.sigmoid(_ref_conv(x, params["w2"], params["b2"]))
    return jnp.transpose(x, (0, 3, 1, 2))


# ---------------------------------- Main ----------------------------------- #

if __name__ == "__main__":
    N, IN_CH, H, W = 2, 4, 16, 16
    HEAD_CONV = 32
    CLASS_NUM = 4

    key = jax.random.PRNGKey(0)
    k_in, k_par = jax.random.split(key)
    x = jax.random.normal(k_in, (N, IN_CH, H, W), jnp.float32)   # NCHW like PyTorch

    # Two-conv head (head_conv_channel > 0).
    params = init_common_head_params(k_par, CLASS_NUM, IN_CH, HEAD_CONV)
    out = jax.block_until_ready(common_head_with_sigmoid(x, params))
    ref = jax.block_until_ready(ref_forward(x, params))
    assert out.shape == (N, CLASS_NUM, H, W), out.shape
    err = float(jnp.max(jnp.abs(out - ref)))
    assert jnp.allclose(out, ref, atol=2e-3, rtol=0.0), f"max abs err {err}"

    # Single-conv head (head_conv_channel == 0) path of the module.
    params0 = init_common_head_params(k_par, CLASS_NUM, IN_CH, 0)
    out0 = jax.block_until_ready(common_head_with_sigmoid(x, params0))
    ref0 = jax.block_until_ready(ref_forward(x, params0))
    assert out0.shape == (N, CLASS_NUM, H, W), out0.shape
    err0 = float(jnp.max(jnp.abs(out0 - ref0)))
    assert jnp.allclose(out0, ref0, atol=2e-3, rtol=0.0), f"max abs err {err0}"

    print("KERNEL_OK")
</pallas_src>

<mosaic_0001>
module attributes {stable_mosaic.version = 11 : i64} {
  func.func @_fused_head_kernel(%arg0: i32, %arg1: memref<1x4x256xf32, #tpu.memory_space<vmem>>, %arg2: memref<9x1x256xf32, #tpu.memory_space<vmem>>, %arg3: memref<9x32x4xf32, #tpu.memory_space<vmem>>, %arg4: memref<32x1xf32, #tpu.memory_space<vmem>>, %arg5: memref<9x8x32xf32, #tpu.memory_space<vmem>>, %arg6: memref<8x1xf32, #tpu.memory_space<vmem>>, %arg7: memref<1x8x256xf32, #tpu.memory_space<vmem>>) attributes {dimension_semantics = [#tpu.dimension_semantics<parallel>], iteration_bounds = array<i64: 2>, scalar_prefetch = 0 : i64, scratch_operands = 0 : i64, tpu.core_type = #tpu.core_type<tc>, window_params = [{transform_indices = @transform_0, window_bounds = array<i64: 1, 4, 256>}, {pipeline_mode = #tpu.pipeline_mode<synchronous>, transform_indices = @transform_1, window_bounds = array<i64: 9, 1, 256>}, {pipeline_mode = #tpu.pipeline_mode<synchronous>, transform_indices = @transform_2, window_bounds = array<i64: 9, 32, 4>}, {pipeline_mode = #tpu.pipeline_mode<synchronous>, transform_indices = @transform_3, window_bounds = array<i64: 32, 1>}, {pipeline_mode = #tpu.pipeline_mode<synchronous>, transform_indices = @transform_4, window_bounds = array<i64: 9, 8, 32>}, {pipeline_mode = #tpu.pipeline_mode<synchronous>, transform_indices = @transform_5, window_bounds = array<i64: 8, 1>}, {transform_indices = @transform_6, window_bounds = array<i64: 1, 8, 256>}]} {
    %c0 = arith.constant 0 : index
    %c0_0 = arith.constant 0 : index
    %c0_1 = arith.constant 0 : index
    %0 = vector.load %arg1[%c0, %c0_0, %c0_1] : memref<1x4x256xf32, #tpu.memory_space<vmem>>, vector<1x4x256xf32>
    %1 = vector.shape_cast %0 : vector<1x4x256xf32> to vector<4x256xf32>
    %c17_i32 = arith.constant 17 : i32
    %2 = tpu.dynamic_rotate %1 by %c17_i32 dim 1 : vector<4x256xf32>, i32 -> vector<4x256xf32>
    %c0_2 = arith.constant 0 : index
    %c0_3 = arith.constant 0 : index
    %c0_4 = arith.constant 0 : index
    %3 = vector.load %arg2[%c0_2, %c0_3, %c0_4] : memref<9x1x256xf32, #tpu.memory_space<vmem>>, vector<1x1x256xf32>
    %4 = vector.shape_cast %3 : vector<1x1x256xf32> to vector<1x256xf32>
    %5 = vector.broadcast %4 : vector<1x256xf32> to vector<4x256xf32>
    %6 = arith.mulf %2, %5 : vector<4x256xf32>
    %c0_5 = arith.constant 0 : index
    %c0_6 = arith.constant 0 : index
    %c0_7 = arith.constant 0 : index
    %7 = vector.load %arg3[%c0_5, %c0_6, %c0_7] : memref<9x32x4xf32, #tpu.memory_space<vmem>>, vector<1x32x4xf32>
    %8 = vector.shape_cast %7 : vector<1x32x4xf32> to vector<32x4xf32>
    %cst = arith.constant dense<0.000000e+00> : vector<32x256xf32>
    %9 = tpu.matmul %8, %6, %cst {dimension_numbers = #tpu.dot_dimension_numbers<[1], [0], [0], [1], [0, 0, 1, 1], [], []>} : vector<32x4xf32>, vector<4x256xf32>, vector<32x256xf32> -> vector<32x256xf32>
    %c16_i32 = arith.constant 16 : i32
    %10 = tpu.dynamic_rotate %1 by %c16_i32 dim 1 : vector<4x256xf32>, i32 -> vector<4x256xf32>
    %c1 = arith.constant 1 : index
    %c0_8 = arith.constant 0 : index
    %c0_9 = arith.constant 0 : index
    %11 = vector.load %arg2[%c1, %c0_8, %c0_9] : memref<9x1x256xf32, #tpu.memory_space<vmem>>, vector<1x1x256xf32>
    %12 = vector.shape_cast %11 : vector<1x1x256xf32> to vector<1x256xf32>
    %13 = vector.broadcast %12 : vector<1x256xf32> to vector<4x256xf32>
    %14 = arith.mulf %10, %13 : vector<4x256xf32>
    %c1_10 = arith.constant 1 : index
    %c0_11 = arith.constant 0 : index
    %c0_12 = arith.constant 0 : index
    %15 = vector.load %arg3[%c1_10, %c0_11, %c0_12] : memref<9x32x4xf32, #tpu.memory_space<vmem>>, vector<1x32x4xf32>
    %16 = vector.shape_cast %15 : vector<1x32x4xf32> to vector<32x4xf32>
    %cst_13 = arith.constant dense<0.000000e+00> : vector<32x256xf32>
    %17 = tpu.matmul %16, %14, %cst_13 {dimension_numbers = #tpu.dot_dimension_numbers<[1], [0], [0], [1], [0, 0, 1, 1], [], []>} : vector<32x4xf32>, vector<4x256xf32>, vector<32x256xf32> -> vector<32x256xf32>
    %18 = arith.addf %9, %17 : vector<32x256xf32>
    %c15_i32 = arith.constant 15 : i32
    %19 = tpu.dynamic_rotate %1 by %c15_i32 dim 1 : vector<4x256xf32>, i32 -> vector<4x256xf32>
    %c2 = arith.constant 2 : index
    %c0_14 = arith.constant 0 : index
    %c0_15 = arith.constant 0 : index
    %20 = vector.load %arg2[%c2, %c0_14, %c0_15] : memref<9x1x256xf32, #tpu.memory_space<vmem>>, vector<1x1x256xf32>
    %21 = vector.shape_cast %20 : vector<1x1x256xf32> to vector<1x256xf32>
    %22 = vector.broadcast %21 : vector<1x256xf32> to vector<4x256xf32>
    %23 = arith.mulf %19, %22 : vector<4x256xf32>
    %c2_16 = arith.constant 2 : index
    %c0_17 = arith.constant 0 : index
    %c0_18 = arith.constant 0 : index
    %24 = vector.load %arg3[%c2_16, %c0_17, %c0_18] : memref<9x32x4xf32, #tpu.memory_space<vmem>>, vector<1x32x4xf32>
    %25 = vector.shape_cast %24 : vector<1x32x4xf32> to vector<32x4xf32>
    %cst_19 = arith.constant dense<0.000000e+00> : vector<32x256xf32>
    %26 = tpu.matmul %25, %23, %cst_19 {dimension_numbers = #tpu.dot_dimension_numbers<[1], [0], [0], [1], [0, 0, 1, 1], [], []>} : vector<32x4xf32>, vector<4x256xf32>, vector<32x256xf32> -> vector<32x256xf32>
    %27 = arith.addf %18, %26 : vector<32x256xf32>
    %c1_i32 = arith.constant 1 : i32
    %28 = tpu.dynamic_rotate %1 by %c1_i32 dim 1 : vector<4x256xf32>, i32 -> vector<4x256xf32>
    %c3 = arith.constant 3 : index
    %c0_20 = arith.constant 0 : index
    %c0_21 = arith.constant 0 : index
    %29 = vector.load %arg2[%c3, %c0_20, %c0_21] : memref<9x1x256xf32, #tpu.memory_space<vmem>>, vector<1x1x256xf32>
    %30 = vector.shape_cast %29 : vector<1x1x256xf32> to vector<1x256xf32>
    %31 = vector.broadcast %30 : vector<1x256xf32> to vector<4x256xf32>
    %32 = arith.mulf %28, %31 : vector<4x256xf32>
    %c3_22 = arith.constant 3 : index
    %c0_23 = arith.constant 0 : index
    %c0_24 = arith.constant 0 : index
    %33 = vector.load %arg3[%c3_22, %c0_23, %c0_24] : memref<9x32x4xf32, #tpu.memory_space<vmem>>, vector<1x32x4xf32>
    %34 = vector.shape_cast %33 : vector<1x32x4xf32> to vector<32x4xf32>
    %cst_25 = arith.constant dense<0.000000e+00> : vector<32x256xf32>
    %35 = tpu.matmul %34, %32, %cst_25 {dimension_numbers = #tpu.dot_dimension_numbers<[1], [0], [0], [1], [0, 0, 1, 1], [], []>} : vector<32x4xf32>, vector<4x256xf32>, vector<32x256xf32> -> vector<32x256xf32>
    %36 = arith.addf %27, %35 : vector<32x256xf32>
    %c4 = arith.constant 4 : index
    %c0_26 = arith.constant 0 : index
    %c0_27 = arith.constant 0 : index
    %37 = vector.load %arg3[%c4, %c0_26, %c0_27] : memref<9x32x4xf32, #tpu.memory_space<vmem>>, vector<1x32x4xf32>
    %38 = vector.shape_cast %37 : vector<1x32x4xf32> to vector<32x4xf32>
    %cst_28 = arith.constant dense<0.000000e+00> : vector<32x256xf32>
    %39 = tpu.matmul %38, %1, %cst_28 {dimension_numbers = #tpu.dot_dimension_numbers<[1], [0], [0], [1], [0, 0, 1, 1], [], []>} : vector<32x4xf32>, vector<4x256xf32>, vector<32x256xf32> -> vector<32x256xf32>
    %40 = arith.addf %36, %39 : vector<32x256xf32>
    %c255_i32 = arith.constant 255 : i32
    %41 = tpu.dynamic_rotate %1 by %c255_i32 dim 1 : vector<4x256xf32>, i32 -> vector<4x256xf32>
    %c5 = arith.constant 5 : index
    %c0_29 = arith.constant 0 : index
    %c0_30 = arith.constant 0 : index
    %42 = vector.load %arg2[%c5, %c0_29, %c0_30] : memref<9x1x256xf32, #tpu.memory_space<vmem>>, vector<1x1x256xf32>
    %43 = vector.shape_cast %42 : vector<1x1x256xf32> to vector<1x256xf32>
    %44 = vector.broadcast %43 : vector<1x256xf32> to vector<4x256xf32>
    %45 = arith.mulf %41, %44 : vector<4x256xf32>
    %c5_31 = arith.constant 5 : index
    %c0_32 = arith.constant 0 : index
    %c0_33 = arith.constant 0 : index
    %46 = vector.load %arg3[%c5_31, %c0_32, %c0_33] : memref<9x32x4xf32, #tpu.memory_space<vmem>>, vector<1x32x4xf32>
    %47 = vector.shape_cast %46 : vector<1x32x4xf32> to vector<32x4xf32>
    %cst_34 = arith.constant dense<0.000000e+00> : vector<32x256xf32>
    %48 = tpu.matmul %47, %45, %cst_34 {dimension_numbers = #tpu.dot_dimension_numbers<[1], [0], [0], [1], [0, 0, 1, 1], [], []>} : vector<32x4xf32>, vector<4x256xf32>, vector<32x256xf32> -> vector<32x256xf32>
    %49 = arith.addf %40, %48 : vector<32x256xf32>
    %c241_i32 = arith.constant 241 : i32
    %50 = tpu.dynamic_rotate %1 by %c241_i32 dim 1 : vector<4x256xf32>, i32 -> vector<4x256xf32>
    %c6 = arith.constant 6 : index
    %c0_35 = arith.constant 0 : index
    %c0_36 = arith.constant 0 : index
    %51 = vector.load %arg2[%c6, %c0_35, %c0_36] : memref<9x1x256xf32, #tpu.memory_space<vmem>>, vector<1x1x256xf32>
    %52 = vector.shape_cast %51 : vector<1x1x256xf32> to vector<1x256xf32>
    %53 = vector.broadcast %52 : vector<1x256xf32> to vector<4x256xf32>
    %54 = arith.mulf %50, %53 : vector<4x256xf32>
    %c6_37 = arith.constant 6 : index
    %c0_38 = arith.constant 0 : index
    %c0_39 = arith.constant 0 : index
    %55 = vector.load %arg3[%c6_37, %c0_38, %c0_39] : memref<9x32x4xf32, #tpu.memory_space<vmem>>, vector<1x32x4xf32>
    %56 = vector.shape_cast %55 : vector<1x32x4xf32> to vector<32x4xf32>
    %cst_40 = arith.constant dense<0.000000e+00> : vector<32x256xf32>
    %57 = tpu.matmul %56, %54, %cst_40 {dimension_numbers = #tpu.dot_dimension_numbers<[1], [0], [0], [1], [0, 0, 1, 1], [], []>} : vector<32x4xf32>, vector<4x256xf32>, vector<32x256xf32> -> vector<32x256xf32>
    %58 = arith.addf %49, %57 : vector<32x256xf32>
    %c240_i32 = arith.constant 240 : i32
    %59 = tpu.dynamic_rotate %1 by %c240_i32 dim 1 : vector<4x256xf32>, i32 -> vector<4x256xf32>
    %c7 = arith.constant 7 : index
    %c0_41 = arith.constant 0 : index
    %c0_42 = arith.constant 0 : index
    %60 = vector.load %arg2[%c7, %c0_41, %c0_42] : memref<9x1x256xf32, #tpu.memory_space<vmem>>, vector<1x1x256xf32>
    %61 = vector.shape_cast %60 : vector<1x1x256xf32> to vector<1x256xf32>
    %62 = vector.broadcast %61 : vector<1x256xf32> to vector<4x256xf32>
    %63 = arith.mulf %59, %62 : vector<4x256xf32>
    %c7_43 = arith.constant 7 : index
    %c0_44 = arith.constant 0 : index
    %c0_45 = arith.constant 0 : index
    %64 = vector.load %arg3[%c7_43, %c0_44, %c0_45] : memref<9x32x4xf32, #tpu.memory_space<vmem>>, vector<1x32x4xf32>
    %65 = vector.shape_cast %64 : vector<1x32x4xf32> to vector<32x4xf32>
    %cst_46 = arith.constant dense<0.000000e+00> : vector<32x256xf32>
    %66 = tpu.matmul %65, %63, %cst_46 {dimension_numbers = #tpu.dot_dimension_numbers<[1], [0], [0], [1], [0, 0, 1, 1], [], []>} : vector<32x4xf32>, vector<4x256xf32>, vector<32x256xf32> -> vector<32x256xf32>
    %67 = arith.addf %58, %66 : vector<32x256xf32>
    %c239_i32 = arith.constant 239 : i32
    %68 = tpu.dynamic_rotate %1 by %c239_i32 dim 1 : vector<4x256xf32>, i32 -> vector<4x256xf32>
    %c8 = arith.constant 8 : index
    %c0_47 = arith.constant 0 : index
    %c0_48 = arith.constant 0 : index
    %69 = vector.load %arg2[%c8, %c0_47, %c0_48] : memref<9x1x256xf32, #tpu.memory_space<vmem>>, vector<1x1x256xf32>
    %70 = vector.shape_cast %69 : vector<1x1x256xf32> to vector<1x256xf32>
    %71 = vector.broadcast %70 : vector<1x256xf32> to vector<4x256xf32>
    %72 = arith.mulf %68, %71 : vector<4x256xf32>
    %c8_49 = arith.constant 8 : index
    %c0_50 = arith.constant 0 : index
    %c0_51 = arith.constant 0 : index
    %73 = vector.load %arg3[%c8_49, %c0_50, %c0_51] : memref<9x32x4xf32, #tpu.memory_space<vmem>>, vector<1x32x4xf32>
    %74 = vector.shape_cast %73 : vector<1x32x4xf32> to vector<32x4xf32>
    %cst_52 = arith.constant dense<0.000000e+00> : vector<32x256xf32>
    %75 = tpu.matmul %74, %72, %cst_52 {dimension_numbers = #tpu.dot_dimension_numbers<[1], [0], [0], [1], [0, 0, 1, 1], [], []>} : vector<32x4xf32>, vector<4x256xf32>, vector<32x256xf32> -> vector<32x256xf32>
    %76 = arith.addf %67, %75 : vector<32x256xf32>
    %c0_53 = arith.constant 0 : index
    %c0_54 = arith.constant 0 : index
    %77 = vector.load %arg4[%c0_53, %c0_54] : memref<32x1xf32, #tpu.memory_space<vmem>>, vector<32x1xf32>
    %78 = vector.broadcast %77 : vector<32x1xf32> to vector<32x256xf32>
    %79 = arith.addf %76, %78 : vector<32x256xf32>
    %cst_55 = arith.constant 0.000000e+00 : f32
    %80 = vector.broadcast %cst_55 : f32 to vector<32x256xf32>
    %81 = arith.maximumf %79, %80 : vector<32x256xf32>
    %c17_i32_56 = arith.constant 17 : i32
    %82 = tpu.dynamic_rotate %81 by %c17_i32_56 dim 1 : vector<32x256xf32>, i32 -> vector<32x256xf32>
    %c0_57 = arith.constant 0 : index
    %c0_58 = arith.constant 0 : index
    %c0_59 = arith.constant 0 : index
    %83 = vector.load %arg2[%c0_57, %c0_58, %c0_59] : memref<9x1x256xf32, #tpu.memory_space<vmem>>, vector<1x1x256xf32>
    %84 = vector.shape_cast %83 : vector<1x1x256xf32> to vector<1x256xf32>
    %85 = vector.broadcast %84 : vector<1x256xf32> to vector<32x256xf32>
    %86 = arith.mulf %82, %85 : vector<32x256xf32>
    %c0_60 = arith.constant 0 : index
    %c0_61 = arith.constant 0 : index
    %c0_62 = arith.constant 0 : index
    %87 = vector.load %arg5[%c0_60, %c0_61, %c0_62] : memref<9x8x32xf32, #tpu.memory_space<vmem>>, vector<1x8x32xf32>
    %88 = vector.shape_cast %87 : vector<1x8x32xf32> to vector<8x32xf32>
    %cst_63 = arith.constant dense<0.000000e+00> : vector<8x256xf32>
    %89 = tpu.matmul %88, %86, %cst_63 {dimension_numbers = #tpu.dot_dimension_numbers<[1], [0], [0], [1], [0, 0, 1, 1], [], []>} : vector<8x32xf32>, vector<32x256xf32>, vector<8x256xf32> -> vector<8x256xf32>
    %c16_i32_64 = arith.constant 16 : i32
    %90 = tpu.dynamic_rotate %81 by %c16_i32_64 dim 1 : vector<32x256xf32>, i32 -> vector<32x256xf32>
    %c1_65 = arith.constant 1 : index
    %c0_66 = arith.constant 0 : index
    %c0_67 = arith.constant 0 : index
    %91 = vector.load %arg2[%c1_65, %c0_66, %c0_67] : memref<9x1x256xf32, #tpu.memory_space<vmem>>, vector<1x1x256xf32>
    %92 = vector.shape_cast %91 : vector<1x1x256xf32> to vector<1x256xf32>
    %93 = vector.broadcast %92 : vector<1x256xf32> to vector<32x256xf32>
    %94 = arith.mulf %90, %93 : vector<32x256xf32>
    %c1_68 = arith.constant 1 : index
    %c0_69 = arith.constant 0 : index
    %c0_70 = arith.constant 0 : index
    %95 = vector.load %arg5[%c1_68, %c0_69, %c0_70] : memref<9x8x32xf32, #tpu.memory_space<vmem>>, vector<1x8x32xf32>
    %96 = vector.shape_cast %95 : vector<1x8x32xf32> to vector<8x32xf32>
    %cst_71 = arith.constant dense<0.000000e+00> : vector<8x256xf32>
    %97 = tpu.matmul %96, %94, %cst_71 {dimension_numbers = #tpu.dot_dimension_numbers<[1], [0], [0], [1], [0, 0, 1, 1], [], []>} : vector<8x32xf32>, vector<32x256xf32>, vector<8x256xf32> -> vector<8x256xf32>
    %98 = arith.addf %89, %97 : vector<8x256xf32>
    %c15_i32_72 = arith.constant 15 : i32
    %99 = tpu.dynamic_rotate %81 by %c15_i32_72 dim 1 : vector<32x256xf32>, i32 -> vector<32x256xf32>
    %c2_73 = arith.constant 2 : index
    %c0_74 = arith.constant 0 : index
    %c0_75 = arith.constant 0 : index
    %100 = vector.load %arg2[%c2_73, %c0_74, %c0_75] : memref<9x1x256xf32, #tpu.memory_space<vmem>>, vector<1x1x256xf32>
    %101 = vector.shape_cast %100 : vector<1x1x256xf32> to vector<1x256xf32>
    %102 = vector.broadcast %101 : vector<1x256xf32> to vector<32x256xf32>
    %103 = arith.mulf %99, %102 : vector<32x256xf32>
    %c2_76 = arith.constant 2 : index
    %c0_77 = arith.constant 0 : index
    %c0_78 = arith.constant 0 : index
    %104 = vector.load %arg5[%c2_76, %c0_77, %c0_78] : memref<9x8x32xf32, #tpu.memory_space<vmem>>, vector<1x8x32xf32>
    %105 = vector.shape_cast %104 : vector<1x8x32xf32> to vector<8x32xf32>
    %cst_79 = arith.constant dense<0.000000e+00> : vector<8x256xf32>
    %106 = tpu.matmul %105, %103, %cst_79 {dimension_numbers = #tpu.dot_dimension_numbers<[1], [0], [0], [1], [0, 0, 1, 1], [], []>} : vector<8x32xf32>, vector<32x256xf32>, vector<8x256xf32> -> vector<8x256xf32>
    %107 = arith.addf %98, %106 : vector<8x256xf32>
    %c1_i32_80 = arith.constant 1 : i32
    %108 = tpu.dynamic_rotate %81 by %c1_i32_80 dim 1 : vector<32x256xf32>, i32 -> vector<32x256xf32>
    %c3_81 = arith.constant 3 : index
    %c0_82 = arith.constant 0 : index
    %c0_83 = arith.constant 0 : index
    %109 = vector.load %arg2[%c3_81, %c0_82, %c0_83] : memref<9x1x256xf32, #tpu.memory_space<vmem>>, vector<1x1x256xf32>
    %110 = vector.shape_cast %109 : vector<1x1x256xf32> to vector<1x256xf32>
    %111 = vector.broadcast %110 : vector<1x256xf32> to vector<32x256xf32>
    %112 = arith.mulf %108, %111 : vector<32x256xf32>
    %c3_84 = arith.constant 3 : index
    %c0_85 = arith.constant 0 : index
    %c0_86 = arith.constant 0 : index
    %113 = vector.load %arg5[%c3_84, %c0_85, %c0_86] : memref<9x8x32xf32, #tpu.memory_space<vmem>>, vector<1x8x32xf32>
    %114 = vector.shape_cast %113 : vector<1x8x32xf32> to vector<8x32xf32>
    %cst_87 = arith.constant dense<0.000000e+00> : vector<8x256xf32>
    %115 = tpu.matmul %114, %112, %cst_87 {dimension_numbers = #tpu.dot_dimension_numbers<[1], [0], [0], [1], [0, 0, 1, 1], [], []>} : vector<8x32xf32>, vector<32x256xf32>, vector<8x256xf32> -> vector<8x256xf32>
    %116 = arith.addf %107, %115 : vector<8x256xf32>
    %c4_88 = arith.constant 4 : index
    %c0_89 = arith.constant 0 : index
    %c0_90 = arith.constant 0 : index
    %117 = vector.load %arg5[%c4_88, %c0_89, %c0_90] : memref<9x8x32xf32, #tpu.memory_space<vmem>>, vector<1x8x32xf32>
    %118 = vector.shape_cast %117 : vector<1x8x32xf32> to vector<8x32xf32>
    %cst_91 = arith.constant dense<0.000000e+00> : vector<8x256xf32>
    %119 = tpu.matmul %118, %81, %cst_91 {dimension_numbers = #tpu.dot_dimension_numbers<[1], [0], [0], [1], [0, 0, 1, 1], [], []>} : vector<8x32xf32>, vector<32x256xf32>, vector<8x256xf32> -> vector<8x256xf32>
    %120 = arith.addf %116, %119 : vector<8x256xf32>
    %c255_i32_92 = arith.constant 255 : i32
    %121 = tpu.dynamic_rotate %81 by %c255_i32_92 dim 1 : vector<32x256xf32>, i32 -> vector<32x256xf32>
    %c5_93 = arith.constant 5 : index
    %c0_94 = arith.constant 0 : index
    %c0_95 = arith.constant 0 : index
    %122 = vector.load %arg2[%c5_93, %c0_94, %c0_95] : memref<9x1x256xf32, #tpu.memory_space<vmem>>, vector<1x1x256xf32>
    %123 = vector.shape_cast %122 : vector<1x1x256xf32> to vector<1x256xf32>
    %124 = vector.broadcast %123 : vector<1x256xf32> to vector<32x256xf32>
    %125 = arith.mulf %121, %124 : vector<32x256xf32>
    %c5_96 = arith.constant 5 : index
    %c0_97 = arith.constant 0 : index
    %c0_98 = arith.constant 0 : index
    %126 = vector.load %arg5[%c5_96, %c0_97, %c0_98] : memref<9x8x32xf32, #tpu.memory_space<vmem>>, vector<1x8x32xf32>
    %127 = vector.shape_cast %126 : vector<1x8x32xf32> to vector<8x32xf32>
    %cst_99 = arith.constant dense<0.000000e+00> : vector<8x256xf32>
    %128 = tpu.matmul %127, %125, %cst_99 {dimension_numbers = #tpu.dot_dimension_numbers<[1], [0], [0], [1], [0, 0, 1, 1], [], []>} : vector<8x32xf32>, vector<32x256xf32>, vector<8x256xf32> -> vector<8x256xf32>
    %129 = arith.addf %120, %128 : vector<8x256xf32>
    %c241_i32_100 = arith.constant 241 : i32
    %130 = tpu.dynamic_rotate %81 by %c241_i32_100 dim 1 : vector<32x256xf32>, i32 -> vector<32x256xf32>
    %c6_101 = arith.constant 6 : index
    %c0_102 = arith.constant 0 : index
    %c0_103 = arith.constant 0 : index
    %131 = vector.load %arg2[%c6_101, %c0_102, %c0_103] : memref<9x1x256xf32, #tpu.memory_space<vmem>>, vector<1x1x256xf32>
    %132 = vector.shape_cast %131 : vector<1x1x256xf32> to vector<1x256xf32>
    %133 = vector.broadcast %132 : vector<1x256xf32> to vector<32x256xf32>
    %134 = arith.mulf %130, %133 : vector<32x256xf32>
    %c6_104 = arith.constant 6 : index
    %c0_105 = arith.constant 0 : index
    %c0_106 = arith.constant 0 : index
    %135 = vector.load %arg5[%c6_104, %c0_105, %c0_106] : memref<9x8x32xf32, #tpu.memory_space<vmem>>, vector<1x8x32xf32>
    %136 = vector.shape_cast %135 : vector<1x8x32xf32> to vector<8x32xf32>
    %cst_107 = arith.constant dense<0.000000e+00> : vector<8x256xf32>
    %137 = tpu.matmul %136, %134, %cst_107 {dimension_numbers = #tpu.dot_dimension_numbers<[1], [0], [0], [1], [0, 0, 1, 1], [], []>} : vector<8x32xf32>, vector<32x256xf32>, vector<8x256xf32> -> vector<8x256xf32>
    %138 = arith.addf %129, %137 : vector<8x256xf32>
    %c240_i32_108 = arith.constant 240 : i32
    %139 = tpu.dynamic_rotate %81 by %c240_i32_108 dim 1 : vector<32x256xf32>, i32 -> vector<32x256xf32>
    %c7_109 = arith.constant 7 : index
    %c0_110 = arith.constant 0 : index
    %c0_111 = arith.constant 0 : index
    %140 = vector.load %arg2[%c7_109, %c0_110, %c0_111] : memref<9x1x256xf32, #tpu.memory_space<vmem>>, vector<1x1x256xf32>
    %141 = vector.shape_cast %140 : vector<1x1x256xf32> to vector<1x256xf32>
    %142 = vector.broadcast %141 : vector<1x256xf32> to vector<32x256xf32>
    %143 = arith.mulf %139, %142 : vector<32x256xf32>
    %c7_112 = arith.constant 7 : index
    %c0_113 = arith.constant 0 : index
    %c0_114 = arith.constant 0 : index
    %144 = vector.load %arg5[%c7_112, %c0_113, %c0_114] : memref<9x8x32xf32, #tpu.memory_space<vmem>>, vector<1x8x32xf32>
    %145 = vector.shape_cast %144 : vector<1x8x32xf32> to vector<8x32xf32>
    %cst_115 = arith.constant dense<0.000000e+00> : vector<8x256xf32>
    %146 = tpu.matmul %145, %143, %cst_115 {dimension_numbers = #tpu.dot_dimension_numbers<[1], [0], [0], [1], [0, 0, 1, 1], [], []>} : vector<8x32xf32>, vector<32x256xf32>, vector<8x256xf32> -> vector<8x256xf32>
    %147 = arith.addf %138, %146 : vector<8x256xf32>
    %c239_i32_116 = arith.constant 239 : i32
    %148 = tpu.dynamic_rotate %81 by %c239_i32_116 dim 1 : vector<32x256xf32>, i32 -> vector<32x256xf32>
    %c8_117 = arith.constant 8 : index
    %c0_118 = arith.constant 0 : index
    %c0_119 = arith.constant 0 : index
    %149 = vector.load %arg2[%c8_117, %c0_118, %c0_119] : memref<9x1x256xf32, #tpu.memory_space<vmem>>, vector<1x1x256xf32>
    %150 = vector.shape_cast %149 : vector<1x1x256xf32> to vector<1x256xf32>
    %151 = vector.broadcast %150 : vector<1x256xf32> to vector<32x256xf32>
    %152 = arith.mulf %148, %151 : vector<32x256xf32>
    %c8_120 = arith.constant 8 : index
    %c0_121 = arith.constant 0 : index
    %c0_122 = arith.constant 0 : index
    %153 = vector.load %arg5[%c8_120, %c0_121, %c0_122] : memref<9x8x32xf32, #tpu.memory_space<vmem>>, vector<1x8x32xf32>
    %154 = vector.shape_cast %153 : vector<1x8x32xf32> to vector<8x32xf32>
    %cst_123 = arith.constant dense<0.000000e+00> : vector<8x256xf32>
    %155 = tpu.matmul %154, %152, %cst_123 {dimension_numbers = #tpu.dot_dimension_numbers<[1], [0], [0], [1], [0, 0, 1, 1], [], []>} : vector<8x32xf32>, vector<32x256xf32>, vector<8x256xf32> -> vector<8x256xf32>
    %156 = arith.addf %147, %155 : vector<8x256xf32>
    %c0_124 = arith.constant 0 : index
    %c0_125 = arith.constant 0 : index
    %157 = vector.load %arg6[%c0_124, %c0_125] : memref<8x1xf32, #tpu.memory_space<vmem>>, vector<8x1xf32>
    %158 = vector.broadcast %157 : vector<8x1xf32> to vector<8x256xf32>
    %159 = arith.addf %156, %158 : vector<8x256xf32>
    %cst_126 = arith.constant 5.000000e-01 : f32
    %160 = vector.broadcast %cst_126 : f32 to vector<8x256xf32>
    %161 = arith.mulf %160, %159 : vector<8x256xf32>
    %162 = math.tanh %161 : vector<8x256xf32>
    %cst_127 = arith.constant 5.000000e-01 : f32
    %163 = vector.broadcast %cst_127 : f32 to vector<8x256xf32>
    %164 = arith.mulf %163, %162 : vector<8x256xf32>
    %cst_128 = arith.constant 5.000000e-01 : f32
    %165 = vector.broadcast %cst_128 : f32 to vector<8x256xf32>
    %166 = arith.addf %164, %165 : vector<8x256xf32>
    %c0_129 = arith.constant 0 : index
    %c0_130 = arith.constant 0 : index
    %c0_131 = arith.constant 0 : index
    %167 = vector.load %arg7[%c0_129, %c0_130, %c0_131] : memref<1x8x256xf32, #tpu.memory_space<vmem>>, vector<1x8x256xf32>
    %168 = vector.shape_cast %167 : vector<1x8x256xf32> to vector<8x256xf32>
    %169 = vector.shape_cast %166 : vector<8x256xf32> to vector<1x8x256xf32>
    tpu.vector_store %arg7[%c0_129, %c0_130, %c0_131], %169 {strides = array<i32>} : memref<1x8x256xf32, #tpu.memory_space<vmem>>, vector<1x8x256xf32>,
    return
  }
  func.func @transform_0(%arg0: i32) -> (i32, i32, i32) {
    %c0_i32 = arith.constant 0 : i32
    %c0_i32_0 = arith.constant 0 : i32
    %c0_i32_1 = arith.constant 0 : i32
    return %arg0, %c0_i32, %c0_i32_0 : i32, i32, i32
  }
  func.func @transform_1(%arg0: i32) -> (i32, i32, i32) {
    %c0_i32 = arith.constant 0 : i32
    %c0_i32_0 = arith.constant 0 : i32
    %c0_i32_1 = arith.constant 0 : i32
    %c0_i32_2 = arith.constant 0 : i32
    return %c0_i32, %c0_i32_0, %c0_i32_1 : i32, i32, i32
  }
  func.func @transform_2(%arg0: i32) -> (i32, i32, i32) {
    %c0_i32 = arith.constant 0 : i32
    %c0_i32_0 = arith.constant 0 : i32
    %c0_i32_1 = arith.constant 0 : i32
    %c0_i32_2 = arith.constant 0 : i32
    return %c0_i32, %c0_i32_0, %c0_i32_1 : i32, i32, i32
  }
  func.func @transform_3(%arg0: i32) -> (i32, i32) {
    %c0_i32 = arith.constant 0 : i32
    %c0_i32_0 = arith.constant 0 : i32
    %c0_i32_1 = arith.constant 0 : i32
    return %c0_i32, %c0_i32_0 : i32, i32
  }
  func.func @transform_4(%arg0: i32) -> (i32, i32, i32) {
    %c0_i32 = arith.constant 0 : i32
    %c0_i32_0 = arith.constant 0 : i32
    %c0_i32_1 = arith.constant 0 : i32
    %c0_i32_2 = arith.constant 0 : i32
    return %c0_i32, %c0_i32_0, %c0_i32_1 : i32, i32, i32
  }
  func.func @transform_5(%arg0: i32) -> (i32, i32) {
    %c0_i32 = arith.constant 0 : i32
    %c0_i32_0 = arith.constant 0 : i32
    %c0_i32_1 = arith.constant 0 : i32
    return %c0_i32, %c0_i32_0 : i32, i32
  }
  func.func @transform_6(%arg0: i32) -> (i32, i32, i32) {
    %c0_i32 = arith.constant 0 : i32
    %c0_i32_0 = arith.constant 0 : i32
    %c0_i32_1 = arith.constant 0 : i32
    return %arg0, %c0_i32, %c0_i32_0 : i32, i32, i32
  }
}

</mosaic_0001>

<llo_original>
// kernel: tpu_custom_call.1
$region0: #{tpu_custom_call.1}
  #allocation0 [shape = 'u32[]', space=smem, size = 0x4, offset = 0x4, fixed_abs, tag = 'smem constant byte address 0x4 - core index']
  #allocation1 [shape = 'u32[144,128]{1,0:T(1,128)}', space=vmem, size = 0x12000, scoped, tag = 'internal scratch']
  %s0 = inlined_call_operand.vmem [shape: f32[2,4,256], index: 0, kind: input, shape index: {}]
  %s1 = inlined_call_operand.vmem [shape: f32[9,1,256], index: 1, kind: input, shape index: {}]
  %s2 = inlined_call_operand.vmem [shape: f32[9,32,4], index: 2, kind: input, shape index: {}]
  %s3 = inlined_call_operand.vmem [shape: f32[32,1], index: 3, kind: input, shape index: {}]
  %s4 = inlined_call_operand.vmem [shape: f32[9,8,32], index: 4, kind: input, shape index: {}]
  %s5 = inlined_call_operand.vmem [shape: f32[8,1], index: 5, kind: input, shape index: {}]
  %s6 = inlined_call_operand.hbm [shape: f32[2,8,256], index: 6, kind: output, shape index: {}]
  %s7 = sld [smem:[#allocation0]]
  $region57: #{tpu_custom_call.1} parent=0
    _
  %s9 = ssub.s32 1, %s7
  %s10 = scalar_select 0, %s9, %s7
  $region1: #{tpu_custom_call.1} parent=0
    #allocation2 [shape = 'u8[16384]{0}', space=vmem, size = 0x4000, scoped, tag = 'output window, operand 0']
    #allocation3 [shape = 's32[2]{0}', space=sflag, size = 0x8, scoped, tag = 'scoped memory for tpu_custom_call.1']
    %11 = vsyncpa [#allocation3], 0
    %s12 = scalar_lea.sflag [#allocation3], 1
    %13 = vsyncpa %s12, 0
    loop: start=0, step=1, limit=4
    $region2: #{tpu_custom_call.1} parent=1 // loop_pre_header
      _
    $region3: #{tpu_custom_call.1} parent=1 // loop_header
      %s15 = sphi 0, %s19
      %p16 = scmp.ge.s32.totalorder %s15, 4
      %s25 = sphi 0, %s27
      %s28 = sphi 0, %s25
      %s29 = sphi 0, %s28
      %s45 = sphi 0, %s29
      %s49 = sphi 0, %s49
      %s51 = sphi 0, %s49
      %s52 = sphi 0, %s51
      %s66 = sphi 0, %s52
      %s70 = sphi 0, %s70
      %s72 = sphi 0, %s70
      %s73 = sphi 0, %s72
      %s87 = sphi 0, %s73
      %s91 = sphi 0, %s91
      %s93 = sphi 0, %s91
      %s94 = sphi 0, %s93
      %s108 = sphi 0, %s94
      %s112 = sphi 0, %s112
      %s114 = sphi 0, %s112
      %s115 = sphi 0, %s114
      %s129 = sphi 0, %s115
      %s133 = sphi 0, %s133
      %s135 = sphi 0, %s133
      %s136 = sphi 0, %s135
      %s150 = sphi 0, %s136
      %s156 = sphi 0, %s158
      %s159 = sphi 0, %s156
      %s160 = sphi 0, %s159
      %s176 = sphi 0, %s160
    $region4: #{tpu_custom_call.1} parent=1 // loop_header_branch
      %18 = sbr.rel (%p16) target = $region8
    $region5: #{tpu_custom_call.1} parent=1 // loop_body
      %s20 = ssub.s32 %s15, 1
      %s21 = ssub.s32 %s15, 2
      %s22 = sadd.s32 %s15, 1
      %s23 = ssub.s32 %s15, %s22
      %p24 = scmp.eq.s32.totalorder %s23, 0
      %s26 = sadd.s32 %s25, 1
      %s27 = scalar_select %p24, %s25, %s26
      %p30 = pneg %p24
      %p31 = scmp.eq.s32.totalorder %s15, 1
      %p32 = por %p30, %p31
      %p33 = scmp.ne.s32.totalorder %s25, %s28
      %p34 = scmp.eq.s32.totalorder %s15, 0
      %p35 = por %p33, %p34
      %p36 = scmp.ne.s32.totalorder %s25, %s28
      %p37 = scmp.eq.s32.totalorder %s20, 1
      %p38 = por %p36, %p37
      %p39 = scmp.ne.s32.totalorder %s28, %s29
      %p40 = scmp.eq.s32.totalorder %s20, 0
      %p41 = por %p39, %p40
      %p42 = scmp.ne.s32.totalorder %s28, %s29
      %p43 = scmp.eq.s32.totalorder %s21, 1
      %p44 = por %p42, %p43
      %p46 = scmp.ne.s32.totalorder %s29, %s45
      %p47 = scmp.eq.s32.totalorder %s21, 0
      %p48 = por %p46, %p47
      %s50 = sadd.s32 %s49, 1
      %p53 = scmp.eq.s32.totalorder %s15, 1
      %p54 = scmp.ne.s32.totalorder %s49, %s51
      %p55 = scmp.eq.s32.totalorder %s15, 0
      %p56 = por %p54, %p55
      %p57 = scmp.ne.s32.totalorder %s49, %s51
      %p58 = scmp.eq.s32.totalorder %s20, 1
      %p59 = por %p57, %p58
      %p60 = scmp.ne.s32.totalorder %s51, %s52
      %p61 = scmp.eq.s32.totalorder %s20, 0
      %p62 = por %p60, %p61
      %p63 = scmp.ne.s32.totalorder %s51, %s52
      %p64 = scmp.eq.s32.totalorder %s21, 1
      %p65 = por %p63, %p64
      %p67 = scmp.ne.s32.totalorder %s52, %s66
      %p68 = scmp.eq.s32.totalorder %s21, 0
      %p69 = por %p67, %p68
      %s71 = sadd.s32 %s70, 1
      %p74 = scmp.eq.s32.totalorder %s15, 1
      %p75 = scmp.ne.s32.totalorder %s70, %s72
      %p76 = scmp.eq.s32.totalorder %s15, 0
      %p77 = por %p75, %p76
      %p78 = scmp.ne.s32.totalorder %s70, %s72
      %p79 = scmp.eq.s32.totalorder %s20, 1
      %p80 = por %p78, %p79
      %p81 = scmp.ne.s32.totalorder %s72, %s73
      %p82 = scmp.eq.s32.totalorder %s20, 0
      %p83 = por %p81, %p82
      %p84 = scmp.ne.s32.totalorder %s72, %s73
      %p85 = scmp.eq.s32.totalorder %s21, 1
      %p86 = por %p84, %p85
      %p88 = scmp.ne.s32.totalorder %s73, %s87
      %p89 = scmp.eq.s32.totalorder %s21, 0
      %p90 = por %p88, %p89
      %s92 = sadd.s32 %s91, 1
      %p95 = scmp.eq.s32.totalorder %s15, 1
      %p96 = scmp.ne.s32.totalorder %s91, %s93
      %p97 = scmp.eq.s32.totalorder %s15, 0
      %p98 = por %p96, %p97
      %p99 = scmp.ne.s32.totalorder %s91, %s93
      %p100 = scmp.eq.s32.totalorder %s20, 1
      %p101 = por %p99, %p100
      %p102 = scmp.ne.s32.totalorder %s93, %s94
      %p103 = scmp.eq.s32.totalorder %s20, 0
      %p104 = por %p102, %p103
      %p105 = scmp.ne.s32.totalorder %s93, %s94
      %p106 = scmp.eq.s32.totalorder %s21, 1
      %p107 = por %p105, %p106
      %p109 = scmp.ne.s32.totalorder %s94, %s108
      %p110 = scmp.eq.s32.totalorder %s21, 0
      %p111 = por %p109, %p110
      %s113 = sadd.s32 %s112, 1
      %p116 = scmp.eq.s32.totalorder %s15, 1
      %p117 = scmp.ne.s32.totalorder %s112, %s114
      %p118 = scmp.eq.s32.totalorder %s15, 0
      %p119 = por %p117, %p118
      %p120 = scmp.ne.s32.totalorder %s112, %s114
      %p121 = scmp.eq.s32.totalorder %s20, 1
      %p122 = por %p120, %p121
      %p123 = scmp.ne.s32.totalorder %s114, %s115
      %p124 = scmp.eq.s32.totalorder %s20, 0
      %p125 = por %p123, %p124
      %p126 = scmp.ne.s32.totalorder %s114, %s115
      %p127 = scmp.eq.s32.totalorder %s21, 1
      %p128 = por %p126, %p127
      %p130 = scmp.ne.s32.totalorder %s115, %s129
      %p131 = scmp.eq.s32.totalorder %s21, 0
      %p132 = por %p130, %p131
      %s134 = sadd.s32 %s133, 1
      %p137 = scmp.eq.s32.totalorder %s15, 1
      %p138 = scmp.ne.s32.totalorder %s133, %s135
      %p139 = scmp.eq.s32.totalorder %s15, 0
      %p140 = por %p138, %p139
      %p141 = scmp.ne.s32.totalorder %s133, %s135
      %p142 = scmp.eq.s32.totalorder %s20, 1
      %p143 = por %p141, %p142
      %p144 = scmp.ne.s32.totalorder %s135, %s136
      %p145 = scmp.eq.s32.totalorder %s20, 0
      %p146 = por %p144, %p145
      %p147 = scmp.ne.s32.totalorder %s135, %s136
      %p148 = scmp.eq.s32.totalorder %s21, 1
      %p149 = por %p147, %p148
      %p151 = scmp.ne.s32.totalorder %s136, %s150
      %p152 = scmp.eq.s32.totalorder %s21, 0
      %p153 = por %p151, %p152
      %s154 = ssub.s32 %s15, %s22
      %p155 = scmp.eq.s32.totalorder %s154, 0
      %s157 = sadd.s32 %s156, 1
      %s158 = scalar_select %p155, %s156, %s157
      %p161 = pneg %p155
      %p162 = scmp.eq.s32.totalorder %s15, 1
      %p163 = por %p161, %p162
      %p164 = scmp.ne.s32.totalorder %s156, %s159
      %p165 = scmp.eq.s32.totalorder %s15, 0
      %p166 = por %p164, %p165
      %p167 = scmp.ne.s32.totalorder %s156, %s159
      %p168 = scmp.eq.s32.totalorder %s20, 1
      %p169 = por %p167, %p168
      %p170 = scmp.ne.s32.totalorder %s159, %s160
      %p171 = scmp.eq.s32.totalorder %s20, 0
      %p172 = por %p170, %p171
      %p173 = scmp.ne.s32.totalorder %s159, %s160
      %p174 = scmp.eq.s32.totalorder %s21, 1
      %p175 = por %p173, %p174
      %p177 = scmp.ne.s32.totalorder %s160, %s176
      %p178 = scmp.eq.s32.totalorder %s21, 0
      %p179 = por %p177, %p178
      %p180 = scmp.le.s32.totalorder 1, %s15
      %p181 = scmp.lt.s32.totalorder %s15, 3
      %p182 = pnand %p180, %p181
      %p183 = pneg %p182
      // Predicated region
      $region9: #{tpu_custom_call.1} parent=5 // pred_check
        _
      $region10: #{tpu_custom_call.1} parent=5 // pred_check_branch
        %185 = sbr.rel (%p182) target = $region12
      $region11: #{tpu_custom_call.1} parent=5 // pred_region
        %s186 = ssub.s32 %s15, 1
        // Predicated region
        $region13: #{tpu_custom_call.1} parent=11 // pred_check
          %p187 = pneg %p62
        $region14: #{tpu_custom_call.1} parent=11 // pred_check_branch
          %189 = sbr.rel (%p187) target = $region16
        $region15: #{tpu_custom_call.1} parent=11 // pred_region
          _
        $region16: #{tpu_custom_call.1} parent=11 // pred_fallthru
          _
        // Predicated region
        $region17: #{tpu_custom_call.1} parent=11 // pred_check
          %p190 = pneg %p83
        $region18: #{tpu_custom_call.1} parent=11 // pred_check_branch
          %192 = sbr.rel (%p190) target = $region20
        $region19: #{tpu_custom_call.1} parent=11 // pred_region
          _
        $region20: #{tpu_custom_call.1} parent=11 // pred_fallthru
          _
        // Predicated region
        $region21: #{tpu_custom_call.1} parent=11 // pred_check
          %p193 = pneg %p104
        $region22: #{tpu_custom_call.1} parent=11 // pred_check_branch
          %195 = sbr.rel (%p193) target = $region24
        $region23: #{tpu_custom_call.1} parent=11 // pred_region
          _
        $region24: #{tpu_custom_call.1} parent=11 // pred_fallthru
          _
        // Predicated region
        $region25: #{tpu_custom_call.1} parent=11 // pred_check
          %p196 = pneg %p125
        $region26: #{tpu_custom_call.1} parent=11 // pred_check_branch
          %198 = sbr.rel (%p196) target = $region28
        $region27: #{tpu_custom_call.1} parent=11 // pred_region
          _
        $region28: #{tpu_custom_call.1} parent=11 // pred_fallthru
          _
        // Predicated region
        $region29: #{tpu_custom_call.1} parent=11 // pred_check
          %p199 = pneg %p146
        $region30: #{tpu_custom_call.1} parent=11 // pred_check_branch
          %201 = sbr.rel (%p199) target = $region32
        $region31: #{tpu_custom_call.1} parent=11 // pred_region
          _
        $region32: #{tpu_custom_call.1} parent=11 // pred_fallthru
          _
      $region12: #{tpu_custom_call.1} parent=5 // pred_fallthru
        _
      %p202 = scmp.lt.s32.totalorder %s15, 2
      // Predicated region
      $region33: #{tpu_custom_call.1} parent=5 // pred_check
        %p203 = pneg %p202
      $region34: #{tpu_custom_call.1} parent=5 // pred_check_branch
        %205 = sbr.rel (%p203) target = $region36
      $region35: #{tpu_custom_call.1} parent=5 // pred_region
        // Predicated region
        $region37: #{tpu_custom_call.1} parent=35 // pred_check
          %p206 = pneg %p35
        $region38: #{tpu_custom_call.1} parent=35 // pred_check_branch
          %208 = sbr.rel (%p206) target = $region40
        $region39: #{tpu_custom_call.1} parent=35 // pred_region
          %p209 = scmp.lt.s32.totalorder %s15, 1
          %s210 = scalar_select %p209, %s15, 1
          %s211 = smul.addr %s210, 2
          %s212 = smul.addr %s211, 4
          %s213 = scalar_lea.vmem %s0, %s212
        $region40: #{tpu_custom_call.1} parent=35 // pred_fallthru
          _
      $region36: #{tpu_custom_call.1} parent=5 // pred_fallthru
        _
      %p214 = scmp.le.s32.totalorder 1, %s15
      %p215 = scmp.lt.s32.totalorder %s15, 3
      %p216 = pnand %p214, %p215
      %p217 = pneg %p216
      // Predicated region
      $region41: #{tpu_custom_call.1} parent=5 // pred_check
        _
      $region42: #{tpu_custom_call.1} parent=5 // pred_check_branch
        %219 = sbr.rel (%p216) target = $region44
      $region43: #{tpu_custom_call.1} parent=5 // pred_region
        %s220 = ssub.s32 %s15, 1
        %p221 = scmp.lt.s32.totalorder %s20, 1
        %s222 = scalar_select %p221, %s20, 1
        %s223 = smul.addr %s222, 2
        %s224 = smul.addr %s223, 4
        %s225 = scalar_lea.vmem %s0, %s224
        %p226 = pneg %p41
        %p227 = pneg %p38
        %p228 = pneg %p62
        %p229 = pneg %p59
        %p230 = pneg %p83
        %p231 = pneg %p80
        %p232 = pneg %p104
        %p233 = pneg %p101
        %p234 = pneg %p125
        %p235 = pneg %p122
        %p236 = pneg %p146
        %p237 = pneg %p143
        %p238 = pneg %p172
        %p239 = pneg %p169
        %s240 = sand.u32 %s159, 1
        %s241 = scalar_lea.sflag [#allocation3], %s240
        %s242 = sand.u32 %s159, 1
        %s243 = smul.addr %s242, 16
        %s244 = scalar_lea.vmem [#allocation2], %s243
        %p245 = scmp.lt.s32.totalorder %s20, 1
        %s246 = scalar_select %p245, %s20, 1
        %s247 = smul.addr %s246, 2
        %s248 = smul.addr %s247, 4
        %s249 = scalar_lea.vmem %s0, %s248
        %v250 = vld [vmem:[%s249] sm:$0xff]
        %v252 = vcombine.high %v250, %v250
        %254 = vrot.lane.b32.xlu0 %v250, 17
        %v255 = vpop.permute.xlu0 %254
        %256 = vrot.lane.b32.xlu0 %v252, 17
        %v257 = vpop.permute.xlu0 %256
        %v258 = vlaneseq
        %v259 = vand.u32 %v258, 127
        %vm260 = vcmp.lt.s32.totalorder %v259, 17
        %v261 = vsel %vm260, %v255, %v257
        %v262 = vsel %vm260, %v257, %v255
        %v263 = vld [vmem:[%s1] sm:$0x3]
        %v265 = vlaneseq
        %v266 = vshrl.u32 %v265, 7
        %v267 = vsub.s32 0, %v266
        %v268 = vrot.slane %v263, %v267
        %v269 = vlaneseq
        %v270 = vshrl.u32 %v269, 7
        %v271 = vsub.s32 1, %v270
        %v272 = vrot.slane %v263, %v271
        %v275 = vmul.f32 %v262, %v268
        %v276 = vmul.f32 %v261, %v272
        %v277 = vld [vmem:[%s2] sm:$0xff]
        %v278 = vld [vmem:[%s2 + $0x8] sm:$0xff]
        %v279 = vld [vmem:[%s2 + $0x10] sm:$0xff]
        %v280 = vld [vmem:[%s2 + $0x18] sm:$0xff]
        %281 = vrot.lane.b32.xlu0 %v250, 16
        %v282 = vpop.permute.xlu0 %281
        %283 = vrot.lane.b32.xlu0 %v252, 16
        %v284 = vpop.permute.xlu0 %283
        %vm285 = vcmp.lt.s32.totalorder %v259, 16
        %v286 = vsel %vm285, %v282, %v284
        %v287 = vsel %vm285, %v284, %v282
        %s288 = scalar_lea.vmem %s1, 2
        %v289 = vld [vmem:[%s288] sm:$0x3]
        %v291 = vlaneseq
        %v292 = vshrl.u32 %v291, 7
        %v293 = vsub.s32 0, %v292
        %v294 = vrot.slane %v289, %v293
        %v295 = vlaneseq
        %v296 = vshrl.u32 %v295, 7
        %v297 = vsub.s32 1, %v296
        %v298 = vrot.slane %v289, %v297
        %v301 = vmul.f32 %v287, %v294
        %v302 = vmul.f32 %v286, %v298
        %s303 = scalar_lea.vmem %s2, 32
        %v304 = vld [vmem:[%s303] sm:$0xff]
        %v305 = vld [vmem:[%s303 + $0x8] sm:$0xff]
        %v306 = vld [vmem:[%s303 + $0x10] sm:$0xff]
        %v307 = vld [vmem:[%s303 + $0x18] sm:$0xff]
        %vm308 = vcmask 31744
        %v310 = vsel %vm308, %v304, 0
        %v313 = vsel %vm308, %v305, 0
        %v316 = vsel %vm308, %v306, 0
        %v319 = vsel %vm308, %v307, 0
        %vm321 = vcmask 1043456
        %v323 = vsel %vm321, %v301, 0
        %v326 = vsel %vm321, %v302, 0
        %328 = vmatprep.subr.mxu0 %v326
        %329 = vmatpush1.msra.mxu0 %v323
        %330 = vmatprep.subr.mxu0 0.0
        %331 = vmatpush1.msra.mxu0 0.0
        %332 = vmatprep.subr.mxu0 0.0
        %333 = vmatpush1.msra.mxu0 0.0
        %334 = vmatprep.subr.mxu0 0.0
        %335 = vmatpush1.msra.mxu0 0.0
        %336 = vmatprep.subr.mxu0 0.0
        %337 = vmatpush1.msra.mxu0 0.0
        %338 = vmatprep.subr.mxu0 0.0
        %339 = vmatpush1.msra.mxu0 0.0
        %340 = vmatprep.subr.mxu0 0.0
        %341 = vmatpush1.msra.mxu0 0.0
        %342 = vmatprep.subr.mxu0 0.0
        %343 = vmatpush1.msra.mxu0 0.0
        %344 = vmatprep.subr.mxu0 0.0
        %345 = vmatpush1.msra.mxu0 0.0
        %346 = vmatprep.subr.mxu0 0.0
        %347 = vmatpush1.msra.mxu0 0.0
        %348 = vmatprep.subr.mxu0 0.0
        %349 = vmatpush1.msra.mxu0 0.0
        %350 = vmatprep.subr.mxu0 0.0
        %351 = vmatpush1.msra.mxu0 0.0
        %352 = vmatprep.subr.mxu0 0.0
        %353 = vmatpush1.msra.mxu0 0.0
        %354 = vmatprep.subr.mxu0 0.0
        %355 = vmatpush1.msra.mxu0 0.0
        %356 = vmatprep.subr.mxu0 0.0
        %357 = vmatpush1.msra.mxu0 0.0
        %358 = vmatprep.subr.mxu0 0.0
        %359 = vmatpush1.msra.mxu0 0.0
        %360 = vmatprep.subr.mxu0 0.0
        %361 = vmatpush1.msra.mxu0 0.0
        %362 = vmatprep.subr.mxu0 0.0
        %363 = vmatpush1.msra.mxu0 0.0
        %364 = vmatprep.subr.mxu0 0.0
        %365 = vmatpush1.msra.mxu0 0.0
        %366 = vmatprep.subr.mxu0 0.0
        %367 = vmatpush1.msra.mxu0 0.0
        %368 = vmatprep.subr.mxu0 0.0
        %369 = vmatpush1.msra.mxu0 0.0
        %370 = vmatprep.subr.mxu0 0.0
        %371 = vmatpush1.msra.mxu0 0.0
        %372 = vmatprep.subr.mxu0 0.0
        %373 = vmatpush1.msra.mxu0 0.0
        %374 = vmatprep.subr.mxu0 0.0
        %375 = vmatpush1.msra.mxu0 0.0
        %376 = vmatprep.subr.mxu0 0.0
        %377 = vmatpush1.msra.mxu0 0.0
        %378 = vmatprep.subr.mxu0 0.0
        %379 = vmatpush1.msra.mxu0 0.0
        %380 = vmatprep.subr.mxu0 0.0
        %381 = vmatpush1.msra.mxu0 0.0
        %382 = vmatprep.subr.mxu0 0.0
        %383 = vmatpush1.msra.mxu0 0.0
        %384 = vmatprep.subr.mxu0 0.0
        %385 = vmatpush1.msra.mxu0 0.0
        %386 = vmatprep.subr.mxu0 0.0
        %387 = vmatpush1.msra.mxu0 0.0
        %388 = vmatprep.subr.mxu0 0.0
        %389 = vmatpush1.msra.mxu0 0.0
        %390 = vmatprep.subr.mxu0 0.0
        %391 = vmatpush1.msra.mxu0 0.0
        %392 = vmatprep.mubr.f32.mxu0 0.0
        %393 = vmatmul.mubr.f32.gmra.mrb[0].mxu0 %v310
        %v394 = vpop.f32.mrb[0].mxu0
        %v395 = vadd.f32 0.0, %v394
        %v396 = vpop.f32.mrb[0].mxu0
        %v397 = vadd.f32 0.0, %v396
        %398 = vmatprep.mubr.f32.mxu0 0.0
        %399 = vmatmul.mubr.f32.gmra.mrb[0].mxu0 %v313
        %v400 = vpop.f32.mrb[0].mxu0
        %v401 = vadd.f32 0.0, %v400
        %v402 = vpop.f32.mrb[0].mxu0
        %v403 = vadd.f32 0.0, %v402
        %404 = vmatprep.mubr.f32.mxu0 0.0
        %405 = vmatmul.mubr.f32.gmra.mrb[0].mxu0 %v316
        %v406 = vpop.f32.mrb[0].mxu0
        %v407 = vadd.f32 0.0, %v406
        %v408 = vpop.f32.mrb[0].mxu0
        %v409 = vadd.f32 0.0, %v408
        %410 = vmatprep.mubr.f32.mxu0 0.0
        %411 = vmatmul.mubr.f32.gmra.mrb[0].mxu0 %v319
        %v412 = vpop.f32.mrb[0].mxu0
        %v413 = vadd.f32 0.0, %v412
        %v414 = vpop.f32.mrb[0].mxu0
        %v415 = vadd.f32 0.0, %v414
        %416 = vdwg.mxu0
        %v418 = vsel %vm308, %v277, 0
        %v421 = vsel %vm308, %v278, 0
        %v424 = vsel %vm308, %v279, 0
        %v427 = vsel %vm308, %v280, 0
        %v430 = vsel %vm321, %v275, 0
        %v433 = vsel %vm321, %v276, 0
        %435 = vmatprep.subr.mxu0 %v433
        %436 = vmatpush1.msra.mxu0 %v430
        %437 = vmatprep.subr.mxu0 0.0
        %438 = vmatpush1.msra.mxu0 0.0
        %439 = vmatprep.subr.mxu0 0.0
        %440 = vmatpush1.msra.mxu0 0.0
        %441 = vmatprep.subr.mxu0 0.0
        %442 = vmatpush1.msra.mxu0 0.0
        %443 = vmatprep.subr.mxu0 0.0
        %444 = vmatpush1.msra.mxu0 0.0
        %445 = vmatprep.subr.mxu0 0.0
        %446 = vmatpush1.msra.mxu0 0.0
        %447 = vmatprep.subr.mxu0 0.0
        %448 = vmatpush1.msra.mxu0 0.0
        %449 = vmatprep.subr.mxu0 0.0
        %450 = vmatpush1.msra.mxu0 0.0
        %451 = vmatprep.subr.mxu0 0.0
        %452 = vmatpush1.msra.mxu0 0.0
        %453 = vmatprep.subr.mxu0 0.0
        %454 = vmatpush1.msra.mxu0 0.0
        %455 = vmatprep.subr.mxu0 0.0
        %456 = vmatpush1.msra.mxu0 0.0
        %457 = vmatprep.subr.mxu0 0.0
        %458 = vmatpush1.msra.mxu0 0.0
        %459 = vmatprep.subr.mxu0 0.0
        %460 = vmatpush1.msra.mxu0 0.0
        %461 = vmatprep.subr.mxu0 0.0
        %462 = vmatpush1.msra.mxu0 0.0
        %463 = vmatprep.subr.mxu0 0.0
        %464 = vmatpush1.msra.mxu0 0.0
        %465 = vmatprep.subr.mxu0 0.0
        %466 = vmatpush1.msra.mxu0 0.0
        %467 = vmatprep.subr.mxu0 0.0
        %468 = vmatpush1.msra.mxu0 0.0
        %469 = vmatprep.subr.mxu0 0.0
        %470 = vmatpush1.msra.mxu0 0.0
        %471 = vmatprep.subr.mxu0 0.0
        %472 = vmatpush1.msra.mxu0 0.0
        %473 = vmatprep.subr.mxu0 0.0
        %474 = vmatpush1.msra.mxu0 0.0
        %475 = vmatprep.subr.mxu0 0.0
        %476 = vmatpush1.msra.mxu0 0.0
        %477 = vmatprep.subr.mxu0 0.0
        %478 = vmatpush1.msra.mxu0 0.0
        %479 = vmatprep.subr.mxu0 0.0
        %480 = vmatpush1.msra.mxu0 0.0
        %481 = vmatprep.subr.mxu0 0.0
        %482 = vmatpush1.msra.mxu0 0.0
        %483 = vmatprep.subr.mxu0 0.0
        %484 = vmatpush1.msra.mxu0 0.0
        %485 = vmatprep.subr.mxu0 0.0
        %486 = vmatpush1.msra.mxu0 0.0
        %487 = vmatprep.subr.mxu0 0.0
        %488 = vmatpush1.msra.mxu0 0.0
        %489 = vmatprep.subr.mxu0 0.0
        %490 = vmatpush1.msra.mxu0 0.0
        %491 = vmatprep.subr.mxu0 0.0
        %492 = vmatpush1.msra.mxu0 0.0
        %493 = vmatprep.subr.mxu0 0.0
        %494 = vmatpush1.msra.mxu0 0.0
        %495 = vmatprep.subr.mxu0 0.0
        %496 = vmatpush1.msra.mxu0 0.0
        %497 = vmatprep.subr.mxu0 0.0
        %498 = vmatpush1.msra.mxu0 0.0
        %499 = vmatprep.mubr.f32.mxu0 0.0
        %500 = vmatmul.mubr.f32.gmra.mrb[0].mxu0 %v418
        %v501 = vpop.f32.mrb[0].mxu0
        %v502 = vadd.f32 %v395, %v501
        %v503 = vpop.f32.mrb[0].mxu0
        %v504 = vadd.f32 %v397, %v503
        %505 = vmatprep.mubr.f32.mxu0 0.0
        %506 = vmatmul.mubr.f32.gmra.mrb[0].mxu0 %v421
        %v507 = vpop.f32.mrb[0].mxu0
        %v508 = vadd.f32 %v401, %v507
        %v509 = vpop.f32.mrb[0].mxu0
        %v510 = vadd.f32 %v403, %v509
        %511 = vmatprep.mubr.f32.mxu0 0.0
        %512 = vmatmul.mubr.f32.gmra.mrb[0].mxu0 %v424
        %v513 = vpop.f32.mrb[0].mxu0
        %v514 = vadd.f32 %v407, %v513
        %v515 = vpop.f32.mrb[0].mxu0
        %v516 = vadd.f32 %v409, %v515
        %517 = vmatprep.mubr.f32.mxu0 0.0
        %518 = vmatmul.mubr.f32.gmra.mrb[0].mxu0 %v427
        %v519 = vpop.f32.mrb[0].mxu0
        %v520 = vadd.f32 %v413, %v519
        %v521 = vpop.f32.mrb[0].mxu0
        %v522 = vadd.f32 %v415, %v521
        %523 = vdwg.mxu0
        %524 = vrot.lane.b32.xlu0 %v250, 15
        %v525 = vpop.permute.xlu0 %524
        %526 = vrot.lane.b32.xlu0 %v252, 15
        %v527 = vpop.permute.xlu0 %526
        %vm528 = vcmp.lt.s32.totalorder %v259, 15
        %v529 = vsel %vm528, %v525, %v527
        %v530 = vsel %vm528, %v527, %v525
        %s531 = scalar_lea.vmem %s1, 4
        %v532 = vld [vmem:[%s531] sm:$0x3]
        %v534 = vlaneseq
        %v535 = vshrl.u32 %v534, 7
        %v536 = vsub.s32 0, %v535
        %v537 = vrot.slane %v532, %v536
        %v538 = vlaneseq
        %v539 = vshrl.u32 %v538, 7
        %v540 = vsub.s32 1, %v539
        %v541 = vrot.slane %v532, %v540
        %v544 = vmul.f32 %v530, %v537
        %v545 = vmul.f32 %v529, %v541
        %s546 = scalar_lea.vmem %s2, 64
        %v547 = vld [vmem:[%s546] sm:$0xff]
        %v548 = vld [vmem:[%s546 + $0x8] sm:$0xff]
        %v549 = vld [vmem:[%s546 + $0x10] sm:$0xff]
        %v550 = vld [vmem:[%s546 + $0x18] sm:$0xff]
        %v552 = vsel %vm308, %v547, 0
        %v555 = vsel %vm308, %v548, 0
        %v558 = vsel %vm308, %v549, 0
        %v561 = vsel %vm308, %v550, 0
        %v564 = vsel %vm321, %v544, 0
        %v567 = vsel %vm321, %v545, 0
        %569 = vmatprep.subr.mxu0 %v567
        %570 = vmatpush1.msra.mxu0 %v564
        %571 = vmatprep.subr.mxu0 0.0
        %572 = vmatpush1.msra.mxu0 0.0
        %573 = vmatprep.subr.mxu0 0.0
        %574 = vmatpush1.msra.mxu0 0.0
        %575 = vmatprep.subr.mxu0 0.0
        %576 = vmatpush1.msra.mxu0 0.0
        %577 = vmatprep.subr.mxu0 0.0
        %578 = vmatpush1.msra.mxu0 0.0
        %579 = vmatprep.subr.mxu0 0.0
        %580 = vmatpush1.msra.mxu0 0.0
        %581 = vmatprep.subr.mxu0 0.0
        %582 = vmatpush1.msra.mxu0 0.0
        %583 = vmatprep.subr.mxu0 0.0
        %584 = vmatpush1.msra.mxu0 0.0
        %585 = vmatprep.subr.mxu0 0.0
        %586 = vmatpush1.msra.mxu0 0.0
        %587 = vmatprep.subr.mxu0 0.0
        %588 = vmatpush1.msra.mxu0 0.0
        %589 = vmatprep.subr.mxu0 0.0
        %590 = vmatpush1.msra.mxu0 0.0
        %591 = vmatprep.subr.mxu0 0.0
        %592 = vmatpush1.msra.mxu0 0.0
        %593 = vmatprep.subr.mxu0 0.0
        %594 = vmatpush1.msra.mxu0 0.0
        %595 = vmatprep.subr.mxu0 0.0
        %596 = vmatpush1.msra.mxu0 0.0
        %597 = vmatprep.subr.mxu0 0.0
        %598 = vmatpush1.msra.mxu0 0.0
        %599 = vmatprep.subr.mxu0 0.0
        %600 = vmatpush1.msra.mxu0 0.0
        %601 = vmatprep.subr.mxu0 0.0
        %602 = vmatpush1.msra.mxu0 0.0
        %603 = vmatprep.subr.mxu0 0.0
        %604 = vmatpush1.msra.mxu0 0.0
        %605 = vmatprep.subr.mxu0 0.0
        %606 = vmatpush1.msra.mxu0 0.0
        %607 = vmatprep.subr.mxu0 0.0
        %608 = vmatpush1.msra.mxu0 0.0
        %609 = vmatprep.subr.mxu0 0.0
        %610 = vmatpush1.msra.mxu0 0.0
        %611 = vmatprep.subr.mxu0 0.0
        %612 = vmatpush1.msra.mxu0 0.0
        %613 = vmatprep.subr.mxu0 0.0
        %614 = vmatpush1.msra.mxu0 0.0
        %615 = vmatprep.subr.mxu0 0.0
        %616 = vmatpush1.msra.mxu0 0.0
        %617 = vmatprep.subr.mxu0 0.0
        %618 = vmatpush1.msra.mxu0 0.0
        %619 = vmatprep.subr.mxu0 0.0
        %620 = vmatpush1.msra.mxu0 0.0
        %621 = vmatprep.subr.mxu0 0.0
        %622 = vmatpush1.msra.mxu0 0.0
        %623 = vmatprep.subr.mxu0 0.0
        %624 = vmatpush1.msra.mxu0 0.0
        %625 = vmatprep.subr.mxu0 0.0
        %626 = vmatpush1.msra.mxu0 0.0
        %627 = vmatprep.subr.mxu0 0.0
        %628 = vmatpush1.msra.mxu0 0.0
        %629 = vmatprep.subr.mxu0 0.0
        %630 = vmatpush1.msra.mxu0 0.0
        %631 = vmatprep.subr.mxu0 0.0
        %632 = vmatpush1.msra.mxu0 0.0
        %633 = vmatprep.mubr.f32.mxu0 0.0
        %634 = vmatmul.mubr.f32.gmra.mrb[0].mxu0 %v552
        %v635 = vpop.f32.mrb[0].mxu0
        %v636 = vadd.f32 0.0, %v635
        %v637 = vpop.f32.mrb[0].mxu0
        %v638 = vadd.f32 0.0, %v637
        %639 = vmatprep.mubr.f32.mxu0 0.0
        %640 = vmatmul.mubr.f32.gmra.mrb[0].mxu0 %v555
        %v641 = vpop.f32.mrb[0].mxu0
        %v642 = vadd.f32 0.0, %v641
        %v643 = vpop.f32.mrb[0].mxu0
        %v644 = vadd.f32 0.0, %v643
        %645 = vmatprep.mubr.f32.mxu0 0.0
        %646 = vmatmul.mubr.f32.gmra.mrb[0].mxu0 %v558
        %v647 = vpop.f32.mrb[0].mxu0
        %v648 = vadd.f32 0.0, %v647
        %v649 = vpop.f32.mrb[0].mxu0
        %v650 = vadd.f32 0.0, %v649
        %651 = vmatprep.mubr.f32.mxu0 0.0
        %652 = vmatmul.mubr.f32.gmra.mrb[0].mxu0 %v561
        %v653 = vpop.f32.mrb[0].mxu0
        %v654 = vadd.f32 0.0, %v653
        %v655 = vpop.f32.mrb[0].mxu0
        %v656 = vadd.f32 0.0, %v655
        %657 = vdwg.mxu0
        %v658 = vadd.f32 %v502, %v636
        %v659 = vadd.f32 %v504, %v638
        %v660 = vadd.f32 %v508, %v642
        %v661 = vadd.f32 %v510, %v644
        %v662 = vadd.f32 %v514, %v648
        %v663 = vadd.f32 %v516, %v650
        %v664 = vadd.f32 %v520, %v654
        %v665 = vadd.f32 %v522, %v656
        %666 = vrot.lane.b32.xlu0 %v250, 1
        %v667 = vpop.permute.xlu0 %666
        %668 = vrot.lane.b32.xlu0 %v252, 1
        %v669 = vpop.permute.xlu0 %668
        %vm670 = vcmp.lt.s32.totalorder %v259, 1
        %v671 = vsel %vm670, %v667, %v669
        %v672 = vsel %vm670, %v669, %v667
        %s673 = scalar_lea.vmem %s1, 6
        %v674 = vld [vmem:[%s673] sm:$0x3]
        %v676 = vlaneseq
        %v677 = vshrl.u32 %v676, 7
        %v678 = vsub.s32 0, %v677
        %v679 = vrot.slane %v674, %v678
        %v680 = vlaneseq
        %v681 = vshrl.u32 %v680, 7
        %v682 = vsub.s32 1, %v681
        %v683 = vrot.slane %v674, %v682
        %v686 = vmul.f32 %v672, %v679
        %v687 = vmul.f32 %v671, %v683
        %s688 = scalar_lea.vmem %s2, 96
        %v689 = vld [vmem:[%s688] sm:$0xff]
        %v690 = vld [vmem:[%s688 + $0x8] sm:$0xff]
        %v691 = vld [vmem:[%s688 + $0x10] sm:$0xff]
        %v692 = vld [vmem:[%s688 + $0x18] sm:$0xff]
        %v694 = vsel %vm308, %v689, 0
        %v697 = vsel %vm308, %v690, 0
        %v700 = vsel %vm308, %v691, 0
        %v703 = vsel %vm308, %v692, 0
        %v706 = vsel %vm321, %v686, 0
        %v709 = vsel %vm321, %v687, 0
        %711 = vmatprep.subr.mxu0 %v709
        %712 = vmatpush1.msra.mxu0 %v706
        %713 = vmatprep.subr.mxu0 0.0
        %714 = vmatpush1.msra.mxu0 0.0
        %715 = vmatprep.subr.mxu0 0.0
        %716 = vmatpush1.msra.mxu0 0.0
        %717 = vmatprep.subr.mxu0 0.0
        %718 = vmatpush1.msra.mxu0 0.0
        %719 = vmatprep.subr.mxu0 0.0
        %720 = vmatpush1.msra.mxu0 0.0
        %721 = vmatprep.subr.mxu0 0.0
        %722 = vmatpush1.msra.mxu0 0.0
        %723 = vmatprep.subr.mxu0 0.0
        %724 = vmatpush1.msra.mxu0 0.0
        %725 = vmatprep.subr.mxu0 0.0
        %726 = vmatpush1.msra.mxu0 0.0
        %727 = vmatprep.subr.mxu0 0.0
        %728 = vmatpush1.msra.mxu0 0.0
        %729 = vmatprep.subr.mxu0 0.0
        %730 = vmatpush1.msra.mxu0 0.0
        %731 = vmatprep.subr.mxu0 0.0
        %732 = vmatpush1.msra.mxu0 0.0
        %733 = vmatprep.subr.mxu0 0.0
        %734 = vmatpush1.msra.mxu0 0.0
        %735 = vmatprep.subr.mxu0 0.0
        %736 = vmatpush1.msra.mxu0 0.0
        %737 = vmatprep.subr.mxu0 0.0
        %738 = vmatpush1.msra.mxu0 0.0
        %739 = vmatprep.subr.mxu0 0.0
        %740 = vmatpush1.msra.mxu0 0.0
        %741 = vmatprep.subr.mxu0 0.0
        %742 = vmatpush1.msra.mxu0 0.0
        %743 = vmatprep.subr.mxu0 0.0
        %744 = vmatpush1.msra.mxu0 0.0
        %745 = vmatprep.subr.mxu0 0.0
        %746 = vmatpush1.msra.mxu0 0.0
        %747 = vmatprep.subr.mxu0 0.0
        %748 = vmatpush1.msra.mxu0 0.0
        %749 = vmatprep.subr.mxu0 0.0
        %750 = vmatpush1.msra.mxu0 0.0
        %751 = vmatprep.subr.mxu0 0.0
        %752 = vmatpush1.msra.mxu0 0.0
        %753 = vmatprep.subr.mxu0 0.0
        %754 = vmatpush1.msra.mxu0 0.0
        %755 = vmatprep.subr.mxu0 0.0
        %756 = vmatpush1.msra.mxu0 0.0
        %757 = vmatprep.subr.mxu0 0.0
        %758 = vmatpush1.msra.mxu0 0.0
        %759 = vmatprep.subr.mxu0 0.0
        %760 = vmatpush1.msra.mxu0 0.0
        %761 = vmatprep.subr.mxu0 0.0
        %762 = vmatpush1.msra.mxu0 0.0
        %763 = vmatprep.subr.mxu0 0.0
        %764 = vmatpush1.msra.mxu0 0.0
        %765 = vmatprep.subr.mxu0 0.0
        %766 = vmatpush1.msra.mxu0 0.0
        %767 = vmatprep.subr.mxu0 0.0
        %768 = vmatpush1.msra.mxu0 0.0
        %769 = vmatprep.subr.mxu0 0.0
        %770 = vmatpush1.msra.mxu0 0.0
        %771 = vmatprep.subr.mxu0 0.0
        %772 = vmatpush1.msra.mxu0 0.0
        %773 = vmatprep.subr.mxu0 0.0
        %774 = vmatpush1.msra.mxu0 0.0
        %775 = vmatprep.mubr.f32.mxu0 0.0
        %776 = vmatmul.mubr.f32.gmra.mrb[0].mxu0 %v694
        %v777 = vpop.f32.mrb[0].mxu0
        %v778 = vadd.f32 0.0, %v777
        %v779 = vpop.f32.mrb[0].mxu0
        %v780 = vadd.f32 0.0, %v779
        %781 = vmatprep.mubr.f32.mxu0 0.0
        %782 = vmatmul.mubr.f32.gmra.mrb[0].mxu0 %v697
        %v783 = vpop.f32.mrb[0].mxu0
        %v784 = vadd.f32 0.0, %v783
        %v785 = vpop.f32.mrb[0].mxu0
        %v786 = vadd.f32 0.0, %v785
        %787 = vmatprep.mubr.f32.mxu0 0.0
        %788 = vmatmul.mubr.f32.gmra.mrb[0].mxu0 %v700
        %v789 = vpop.f32.mrb[0].mxu0
        %v790 = vadd.f32 0.0, %v789
        %v791 = vpop.f32.mrb[0].mxu0
        %v792 = vadd.f32 0.0, %v791
        %793 = vmatprep.mubr.f32.mxu0 0.0
        %794 = vmatmul.mubr.f32.gmra.mrb[0].mxu0 %v703
        %v795 = vpop.f32.mrb[0].mxu0
        %v796 = vadd.f32 0.0, %v795
        %v797 = vpop.f32.mrb[0].mxu0
        %v798 = vadd.f32 0.0, %v797
        %799 = vdwg.mxu0
        %v800 = vadd.f32 %v658, %v778
        %v801 = vadd.f32 %v659, %v780
        %v802 = vadd.f32 %v660, %v784
        %v803 = vadd.f32 %v661, %v786
        %v804 = vadd.f32 %v662, %v790
        %v805 = vadd.f32 %v663, %v792
        %v806 = vadd.f32 %v664, %v796
        %v807 = vadd.f32 %v665, %v798
        %s808 = scalar_lea.vmem %s2, 128
        %v809 = vld [vmem:[%s808] sm:$0xff]
        %v810 = vld [vmem:[%s808 + $0x8] sm:$0xff]
        %v811 = vld [vmem:[%s808 + $0x10] sm:$0xff]
        %v812 = vld [vmem:[%s808 + $0x18] sm:$0xff]
        %v814 = vsel %vm308, %v809, 0
        %v817 = vsel %vm308, %v810, 0
        %v820 = vsel %vm308, %v811, 0
        %v823 = vsel %vm308, %v812, 0
        %v825 = vsel %vm321, %v250, 0
        %v827 = vsel %vm321, %v252, 0
        %829 = vmatprep.subr.mxu0 %v827
        %830 = vmatpush1.msra.mxu0 %v825
        %831 = vmatprep.subr.mxu0 0.0
        %832 = vmatpush1.msra.mxu0 0.0
        %833 = vmatprep.subr.mxu0 0.0
        %834 = vmatpush1.msra.mxu0 0.0
        %835 = vmatprep.subr.mxu0 0.0
        %836 = vmatpush1.msra.mxu0 0.0
        %837 = vmatprep.subr.mxu0 0.0
        %838 = vmatpush1.msra.mxu0 0.0
        %839 = vmatprep.subr.mxu0 0.0
        %840 = vmatpush1.msra.mxu0 0.0
        %841 = vmatprep.subr.mxu0 0.0
        %842 = vmatpush1.msra.mxu0 0.0
        %843 = vmatprep.subr.mxu0 0.0
        %844 = vmatpush1.msra.mxu0 0.0
        %845 = vmatprep.subr.mxu0 0.0
        %846 = vmatpush1.msra.mxu0 0.0
        %847 = vmatprep.subr.mxu0 0.0
        %848 = vmatpush1.msra.mxu0 0.0
        %849 = vmatprep.subr.mxu0 0.0
        %850 = vmatpush1.msra.mxu0 0.0
        %851 = vmatprep.subr.mxu0 0.0
        %852 = vmatpush1.msra.mxu0 0.0
        %853 = vmatprep.subr.mxu0 0.0
        %854 = vmatpush1.msra.mxu0 0.0
        %855 = vmatprep.subr.mxu0 0.0
        %856 = vmatpush1.msra.mxu0 0.0
        %857 = vmatprep.subr.mxu0 0.0
        %858 = vmatpush1.msra.mxu0 0.0
        %859 = vmatprep.subr.mxu0 0.0
        %860 = vmatpush1.msra.mxu0 0.0
        %861 = vmatprep.subr.mxu0 0.0
        %862 = vmatpush1.msra.mxu0 0.0
        %863 = vmatprep.subr.mxu0 0.0
        %864 = vmatpush1.msra.mxu0 0.0
        %865 = vmatprep.subr.mxu0 0.0
        %866 = vmatpush1.msra.mxu0 0.0
        %867 = vmatprep.subr.mxu0 0.0
        %868 = vmatpush1.msra.mxu0 0.0
        %869 = vmatprep.subr.mxu0 0.0
        %870 = vmatpush1.msra.mxu0 0.0
        %871 = vmatprep.subr.mxu0 0.0
        %872 = vmatpush1.msra.mxu0 0.0
        %873 = vmatprep.subr.mxu0 0.0
        %874 = vmatpush1.msra.mxu0 0.0
        %875 = vmatprep.subr.mxu0 0.0
        %876 = vmatpush1.msra.mxu0 0.0
        %877 = vmatprep.subr.mxu0 0.0
        %878 = vmatpush1.msra.mxu0 0.0
        %879 = vmatprep.subr.mxu0 0.0
        %880 = vmatpush1.msra.mxu0 0.0
        %881 = vmatprep.subr.mxu0 0.0
        %882 = vmatpush1.msra.mxu0 0.0
        %883 = vmatprep.subr.mxu0 0.0
        %884 = vmatpush1.msra.mxu0 0.0
        %885 = vmatprep.subr.mxu0 0.0
        %886 = vmatpush1.msra.mxu0 0.0
        %887 = vmatprep.subr.mxu0 0.0
        %888 = vmatpush1.msra.mxu0 0.0
        %889 = vmatprep.subr.mxu0 0.0
        %890 = vmatpush1.msra.mxu0 0.0
        %891 = vmatprep.subr.mxu0 0.0
        %892 = vmatpush1.msra.mxu0 0.0
        %893 = vmatprep.mubr.f32.mxu0 0.0
        %894 = vmatmul.mubr.f32.gmra.mrb[0].mxu0 %v814
        %v895 = vpop.f32.mrb[0].mxu0
        %v896 = vadd.f32 0.0, %v895
        %v897 = vpop.f32.mrb[0].mxu0
        %v898 = vadd.f32 0.0, %v897
        %899 = vmatprep.mubr.f32.mxu0 0.0
        %900 = vmatmul.mubr.f32.gmra.mrb[0].mxu0 %v817
        %v901 = vpop.f32.mrb[0].mxu0
        %v902 = vadd.f32 0.0, %v901
        %v903 = vpop.f32.mrb[0].mxu0
        %v904 = vadd.f32 0.0, %v903
        %905 = vmatprep.mubr.f32.mxu0 0.0
        %906 = vmatmul.mubr.f32.gmra.mrb[0].mxu0 %v820
        %v907 = vpop.f32.mrb[0].mxu0
        %v908 = vadd.f32 0.0, %v907
        %v909 = vpop.f32.mrb[0].mxu0
        %v910 = vadd.f32 0.0, %v909
        %911 = vmatprep.mubr.f32.mxu0 0.0
        %912 = vmatmul.mubr.f32.gmra.mrb[0].mxu0 %v823
        %v913 = vpop.f32.mrb[0].mxu0
        %v914 = vadd.f32 0.0, %v913
        %v915 = vpop.f32.mrb[0].mxu0
        %v916 = vadd.f32 0.0, %v915
        %917 = vdwg.mxu0
        %v918 = vadd.f32 %v800, %v896
        %v919 = vadd.f32 %v801, %v898
        %v920 = vadd.f32 %v802, %v902
        %v921 = vadd.f32 %v803, %v904
        %v922 = vadd.f32 %v804, %v908
        %v923 = vadd.f32 %v805, %v910
        %v924 = vadd.f32 %v806, %v914
        %v925 = vadd.f32 %v807, %v916
        %926 = vrot.lane.b32.xlu0 %v250, 127
        %v927 = vpop.permute.xlu0 %926
        %928 = vrot.lane.b32.xlu0 %v252, 127
        %v929 = vpop.permute.xlu0 %928
        %vm930 = vcmp.lt.s32.totalorder %v259, 127
        %v931 = vsel %vm930, %v927, %v929
        %v932 = vsel %vm930, %v929, %v927
        %s933 = scalar_lea.vmem %s1, 10
        %v934 = vld [vmem:[%s933] sm:$0x3]
        %v936 = vlaneseq
        %v937 = vshrl.u32 %v936, 7
        %v938 = vsub.s32 0, %v937
        %v939 = vrot.slane %v934, %v938
        %v940 = vlaneseq
        %v941 = vshrl.u32 %v940, 7
        %v942 = vsub.s32 1, %v941
        %v943 = vrot.slane %v934, %v942
        %v946 = vmul.f32 %v931, %v939
        %v947 = vmul.f32 %v932, %v943
        %s948 = scalar_lea.vmem %s2, 160
        %v949 = vld [vmem:[%s948] sm:$0xff]
        %v950 = vld [vmem:[%s948 + $0x8] sm:$0xff]
        %v951 = vld [vmem:[%s948 + $0x10] sm:$0xff]
        %v952 = vld [vmem:[%s948 + $0x18] sm:$0xff]
        %v954 = vsel %vm308, %v949, 0
        %v957 = vsel %vm308, %v950, 0
        %v960 = vsel %vm308, %v951, 0
        %v963 = vsel %vm308, %v952, 0
        %v966 = vsel %vm321, %v946, 0
        %v969 = vsel %vm321, %v947, 0
        %971 = vmatprep.subr.mxu0 %v969
        %972 = vmatpush1.msra.mxu0 %v966
        %973 = vmatprep.subr.mxu0 0.0
        %974 = vmatpush1.msra.mxu0 0.0
        %975 = vmatprep.subr.mxu0 0.0
        %976 = vmatpush1.msra.mxu0 0.0
        %977 = vmatprep.subr.mxu0 0.0
        %978 = vmatpush1.msra.mxu0 0.0
        %979 = vmatprep.subr.mxu0 0.0
        %980 = vmatpush1.msra.mxu0 0.0
        %981 = vmatprep.subr.mxu0 0.0
        %982 = vmatpush1.msra.mxu0 0.0
        %983 = vmatprep.subr.mxu0 0.0
        %984 = vmatpush1.msra.mxu0 0.0
        %985 = vmatprep.subr.mxu0 0.0
        %986 = vmatpush1.msra.mxu0 0.0
        %987 = vmatprep.subr.mxu0 0.0
        %988 = vmatpush1.msra.mxu0 0.0
        %989 = vmatprep.subr.mxu0 0.0
        %990 = vmatpush1.msra.mxu0 0.0
        %991 = vmatprep.subr.mxu0 0.0
        %992 = vmatpush1.msra.mxu0 0.0
        %993 = vmatprep.subr.mxu0 0.0
        %994 = vmatpush1.msra.mxu0 0.0
        %995 = vmatprep.subr.mxu0 0.0
        %996 = vmatpush1.msra.mxu0 0.0
        %997 = vmatprep.subr.mxu0 0.0
        %998 = vmatpush1.msra.mxu0 0.0
        %999 = vmatprep.subr.mxu0 0.0
        %1000 = vmatpush1.msra.mxu0 0.0
        %1001 = vmatprep.subr.mxu0 0.0
        %1002 = vmatpush1.msra.mxu0 0.0
        %1003 = vmatprep.subr.mxu0 0.0
        %1004 = vmatpush1.msra.mxu0 0.0
        %1005 = vmatprep.subr.mxu0 0.0
        %1006 = vmatpush1.msra.mxu0 0.0
        %1007 = vmatprep.subr.mxu0 0.0
        %1008 = vmatpush1.msra.mxu0 0.0
        %1009 = vmatprep.subr.mxu0 0.0
        %1010 = vmatpush1.msra.mxu0 0.0
        %1011 = vmatprep.subr.mxu0 0.0
        %1012 = vmatpush1.msra.mxu0 0.0
        %1013 = vmatprep.subr.mxu0 0.0
        %1014 = vmatpush1.msra.mxu0 0.0
        %1015 = vmatprep.subr.mxu0 0.0
        %1016 = vmatpush1.msra.mxu0 0.0
        %1017 = vmatprep.subr.mxu0 0.0
        %1018 = vmatpush1.msra.mxu0 0.0
        %1019 = vmatprep.subr.mxu0 0.0
        %1020 = vmatpush1.msra.mxu0 0.0
        %1021 = vmatprep.subr.mxu0 0.0
        %1022 = vmatpush1.msra.mxu0 0.0
        %1023 = vmatprep.subr.mxu0 0.0
        %1024 = vmatpush1.msra.mxu0 0.0
        %1025 = vmatprep.subr.mxu0 0.0
        %1026 = vmatpush1.msra.mxu0 0.0
        %1027 = vmatprep.subr.mxu0 0.0
        %1028 = vmatpush1.msra.mxu0 0.0
        %1029 = vmatprep.subr.mxu0 0.0
        %1030 = vmatpush1.msra.mxu0 0.0
        %1031 = vmatprep.subr.mxu0 0.0
        %1032 = vmatpush1.msra.mxu0 0.0
        %1033 = vmatprep.subr.mxu0 0.0
        %1034 = vmatpush1.msra.mxu0 0.0
        %1035 = vmatprep.mubr.f32.mxu0 0.0
        %1036 = vmatmul.mubr.f32.gmra.mrb[0].mxu0 %v954
        %v1037 = vpop.f32.mrb[0].mxu0
        %v1038 = vadd.f32 0.0, %v1037
        %v1039 = vpop.f32.mrb[0].mxu0
        %v1040 = vadd.f32 0.0, %v1039
        %1041 = vmatprep.mubr.f32.mxu0 0.0
        %1042 = vmatmul.mubr.f32.gmra.mrb[0].mxu0 %v957
        %v1043 = vpop.f32.mrb[0].mxu0
        %v1044 = vadd.f32 0.0, %v1043
        %v1045 = vpop.f32.mrb[0].mxu0
        %v1046 = vadd.f32 0.0, %v1045
        %1047 = vmatprep.mubr.f32.mxu0 0.0
        %1048 = vmatmul.mubr.f32.gmra.mrb[0].mxu0 %v960
        %v1049 = vpop.f32.mrb[0].mxu0
        %v1050 = vadd.f32 0.0, %v1049
        %v1051 = vpop.f32.mrb[0].mxu0
        %v1052 = vadd.f32 0.0, %v1051
        %1053 = vmatprep.mubr.f32.mxu0 0.0
        %1054 = vmatmul.mubr.f32.gmra.mrb[0].mxu0 %v963
        %v1055 = vpop.f32.mrb[0].mxu0
        %v1056 = vadd.f32 0.0, %v1055
        %v1057 = vpop.f32.mrb[0].mxu0
        %v1058 = vadd.f32 0.0, %v1057
        %1059 = vdwg.mxu0
        %v1060 = vadd.f32 %v918, %v1038
        %v1061 = vadd.f32 %v919, %v1040
        %v1062 = vadd.f32 %v920, %v1044
        %v1063 = vadd.f32 %v921, %v1046
        %v1064 = vadd.f32 %v922, %v1050
        %v1065 = vadd.f32 %v923, %v1052
        %v1066 = vadd.f32 %v924, %v1056
        %v1067 = vadd.f32 %v925, %v1058
        %1068 = vrot.lane.b32.xlu0 %v250, 113
        %v1069 = vpop.permute.xlu0 %1068
        %1070 = vrot.lane.b32.xlu0 %v252, 113
        %v1071 = vpop.permute.xlu0 %1070
        %vm1072 = vcmp.lt.s32.totalorder %v259, 113
        %v1073 = vsel %vm1072, %v1069, %v1071
        %v1074 = vsel %vm1072, %v1071, %v1069
        %s1075 = scalar_lea.vmem %s1, 12
        %v1076 = vld [vmem:[%s1075] sm:$0x3]
        %v1078 = vlaneseq
        %v1079 = vshrl.u32 %v1078, 7
        %v1080 = vsub.s32 0, %v1079
        %v1081 = vrot.slane %v1076, %v1080
        %v1082 = vlaneseq
        %v1083 = vshrl.u32 %v1082, 7
        %v1084 = vsub.s32 1, %v1083
        %v1085 = vrot.slane %v1076, %v1084
        %v1088 = vmul.f32 %v1073, %v1081
        %v1089 = vmul.f32 %v1074, %v1085
        %s1090 = scalar_lea.vmem %s2, 192
        %v1091 = vld [vmem:[%s1090] sm:$0xff]
        %v1092 = vld [vmem:[%s1090 + $0x8] sm:$0xff]
        %v1093 = vld [vmem:[%s1090 + $0x10] sm:$0xff]
        %v1094 = vld [vmem:[%s1090 + $0x18] sm:$0xff]
        %v1096 = vsel %vm308, %v1091, 0
        %v1099 = vsel %vm308, %v1092, 0
        %v1102 = vsel %vm308, %v1093, 0
        %v1105 = vsel %vm308, %v1094, 0
        %v1108 = vsel %vm321, %v1088, 0
        %v1111 = vsel %vm321, %v1089, 0
        %1113 = vmatprep.subr.mxu0 %v1111
        %1114 = vmatpush1.msra.mxu0 %v1108
        %1115 = vmatprep.subr.mxu0 0.0
        %1116 = vmatpush1.msra.mxu0 0.0
        %1117 = vmatprep.subr.mxu0 0.0
        %1118 = vmatpush1.msra.mxu0 0.0
        %1119 = vmatprep.subr.mxu0 0.0
        %1120 = vmatpush1.msra.mxu0 0.0
        %1121 = vmatprep.subr.mxu0 0.0
        %1122 = vmatpush1.msra.mxu0 0.0
        %1123 = vmatprep.subr.mxu0 0.0
        %1124 = vmatpush1.msra.mxu0 0.0
        %1125 = vmatprep.subr.mxu0 0.0
        %1126 = vmatpush1.msra.mxu0 0.0
        %1127 = vmatprep.subr.mxu0 0.0
        %1128 = vmatpush1.msra.mxu0 0.0
        %1129 = vmatprep.subr.mxu0 0.0
        %1130 = vmatpush1.msra.mxu0 0.0
        %1131 = vmatprep.subr.mxu0 0.0
        %1132 = vmatpush1.msra.mxu0 0.0
        %1133 = vmatprep.subr.mxu0 0.0
        %1134 = vmatpush1.msra.mxu0 0.0
        %1135 = vmatprep.subr.mxu0 0.0
        %1136 = vmatpush1.msra.mxu0 0.0
        %1137 = vmatprep.subr.mxu0 0.0
        %1138 = vmatpush1.msra.mxu0 0.0
        %1139 = vmatprep.subr.mxu0 0.0
        %1140 = vmatpush1.msra.mxu0 0.0
        %1141 = vmatprep.subr.mxu0 0.0
        %1142 = vmatpush1.msra.mxu0 0.0
        %1143 = vmatprep.subr.mxu0 0.0
        %1144 = vmatpush1.msra.mxu0 0.0
        %1145 = vmatprep.subr.mxu0 0.0
        %1146 = vmatpush1.msra.mxu0 0.0
        %1147 = vmatprep.subr.mxu0 0.0
        %1148 = vmatpush1.msra.mxu0 0.0
        %1149 = vmatprep.subr.mxu0 0.0
        %1150 = vmatpush1.msra.mxu0 0.0
        %1151 = vmatprep.subr.mxu0 0.0
        %1152 = vmatpush1.msra.mxu0 0.0
        %1153 = vmatprep.subr.mxu0 0.0
        %1154 = vmatpush1.msra.mxu0 0.0
        %1155 = vmatprep.subr.mxu0 0.0
        %1156 = vmatpush1.msra.mxu0 0.0
        %1157 = vmatprep.subr.mxu0 0.0
        %1158 = vmatpush1.msra.mxu0 0.0
        %1159 = vmatprep.subr.mxu0 0.0
        %1160 = vmatpush1.msra.mxu0 0.0
        %1161 = vmatprep.subr.mxu0 0.0
        %1162 = vmatpush1.msra.mxu0 0.0
        %1163 = vmatprep.subr.mxu0 0.0
        %1164 = vmatpush1.msra.mxu0 0.0
        %1165 = vmatprep.subr.mxu0 0.0
        %1166 = vmatpush1.msra.mxu0 0.0
        %1167 = vmatprep.subr.mxu0 0.0
        %1168 = vmatpush1.msra.mxu0 0.0
        %1169 = vmatprep.subr.mxu0 0.0
        %1170 = vmatpush1.msra.mxu0 0.0
        %1171 = vmatprep.subr.mxu0 0.0
        %1172 = vmatpush1.msra.mxu0 0.0
        %1173 = vmatprep.subr.mxu0 0.0
        %1174 = vmatpush1.msra.mxu0 0.0
        %1175 = vmatprep.subr.mxu0 0.0
        %1176 = vmatpush1.msra.mxu0 0.0
        %1177 = vmatprep.mubr.f32.mxu0 0.0
        %1178 = vmatmul.mubr.f32.gmra.mrb[0].mxu0 %v1096
        %v1179 = vpop.f32.mrb[0].mxu0
        %v1180 = vadd.f32 0.0, %v1179
        %v1181 = vpop.f32.mrb[0].mxu0
        %v1182 = vadd.f32 0.0, %v1181
        %1183 = vmatprep.mubr.f32.mxu0 0.0
        %1184 = vmatmul.mubr.f32.gmra.mrb[0].mxu0 %v1099
        %v1185 = vpop.f32.mrb[0].mxu0
        %v1186 = vadd.f32 0.0, %v1185
        %v1187 = vpop.f32.mrb[0].mxu0
        %v1188 = vadd.f32 0.0, %v1187
        %1189 = vmatprep.mubr.f32.mxu0 0.0
        %1190 = vmatmul.mubr.f32.gmra.mrb[0].mxu0 %v1102
        %v1191 = vpop.f32.mrb[0].mxu0
        %v1192 = vadd.f32 0.0, %v1191
        %v1193 = vpop.f32.mrb[0].mxu0
        %v1194 = vadd.f32 0.0, %v1193
        %1195 = vmatprep.mubr.f32.mxu0 0.0
        %1196 = vmatmul.mubr.f32.gmra.mrb[0].mxu0 %v1105
        %v1197 = vpop.f32.mrb[0].mxu0
        %v1198 = vadd.f32 0.0, %v1197
        %v1199 = vpop.f32.mrb[0].mxu0
        %v1200 = vadd.f32 0.0, %v1199
        %1201 = vdwg.mxu0
        %v1202 = vadd.f32 %v1060, %v1180
        %v1203 = vadd.f32 %v1061, %v1182
        %v1204 = vadd.f32 %v1062, %v1186
        %v1205 = vadd.f32 %v1063, %v1188
        %v1206 = vadd.f32 %v1064, %v1192
        %v1207 = vadd.f32 %v1065, %v1194
        %v1208 = vadd.f32 %v1066, %v1198
        %v1209 = vadd.f32 %v1067, %v1200
        %1210 = vrot.lane.b32.xlu0 %v250, 112
        %v1211 = vpop.permute.xlu0 %1210
        %1212 = vrot.lane.b32.xlu0 %v252, 112
        %v1213 = vpop.permute.xlu0 %1212
        %vm1214 = vcmp.lt.s32.totalorder %v259, 112
        %v1215 = vsel %vm1214, %v1211, %v1213
        %v1216 = vsel %vm1214, %v1213, %v1211
        %s1217 = scalar_lea.vmem %s1, 14
        %v1218 = vld [vmem:[%s1217] sm:$0x3]
        %v1220 = vlaneseq
        %v1221 = vshrl.u32 %v1220, 7
        %v1222 = vsub.s32 0, %v1221
        %v1223 = vrot.slane %v1218, %v1222
        %v1224 = vlaneseq
        %v1225 = vshrl.u32 %v1224, 7
        %v1226 = vsub.s32 1, %v1225
        %v1227 = vrot.slane %v1218, %v1226
        %v1230 = vmul.f32 %v1215, %v1223
        %v1231 = vmul.f32 %v1216, %v1227
        %s1232 = scalar_lea.vmem %s2, 224
        %v1233 = vld [vmem:[%s1232] sm:$0xff]
        %v1234 = vld [vmem:[%s1232 + $0x8] sm:$0xff]
        %v1235 = vld [vmem:[%s1232 + $0x10] sm:$0xff]
        %v1236 = vld [vmem:[%s1232 + $0x18] sm:$0xff]
        %v1238 = vsel %vm308, %v1233, 0
        %v1241 = vsel %vm308, %v1234, 0
        %v1244 = vsel %vm308, %v1235, 0
        %v1247 = vsel %vm308, %v1236, 0
        %v1250 = vsel %vm321, %v1230, 0
        %v1253 = vsel %vm321, %v1231, 0
        %1255 = vmatprep.subr.mxu0 %v1253
        %1256 = vmatpush1.msra.mxu0 %v1250
        %1257 = vmatprep.subr.mxu0 0.0
        %1258 = vmatpush1.msra.mxu0 0.0
        %1259 = vmatprep.subr.mxu0 0.0
        %1260 = vmatpush1.msra.mxu0 0.0
        %1261 = vmatprep.subr.mxu0 0.0
        %1262 = vmatpush1.msra.mxu0 0.0
        %1263 = vmatprep.subr.mxu0 0.0
        %1264 = vmatpush1.msra.mxu0 0.0
        %1265 = vmatprep.subr.mxu0 0.0
        %1266 = vmatpush1.msra.mxu0 0.0
        %1267 = vmatprep.subr.mxu0 0.0
        %1268 = vmatpush1.msra.mxu0 0.0
        %1269 = vmatprep.subr.mxu0 0.0
        %1270 = vmatpush1.msra.mxu0 0.0
        %1271 = vmatprep.subr.mxu0 0.0
        %1272 = vmatpush1.msra.mxu0 0.0
        %1273 = vmatprep.subr.mxu0 0.0
        %1274 = vmatpush1.msra.mxu0 0.0
        %1275 = vmatprep.subr.mxu0 0.0
        %1276 = vmatpush1.msra.mxu0 0.0
        %1277 = vmatprep.subr.mxu0 0.0
        %1278 = vmatpush1.msra.mxu0 0.0
        %1279 = vmatprep.subr.mxu0 0.0
        %1280 = vmatpush1.msra.mxu0 0.0
        %1281 = vmatprep.subr.mxu0 0.0
        %1282 = vmatpush1.msra.mxu0 0.0
        %1283 = vmatprep.subr.mxu0 0.0
        %1284 = vmatpush1.msra.mxu0 0.0
        %1285 = vmatprep.subr.mxu0 0.0
        %1286 = vmatpush1.msra.mxu0 0.0
        %1287 = vmatprep.subr.mxu0 0.0
        %1288 = vmatpush1.msra.mxu0 0.0
        %1289 = vmatprep.subr.mxu0 0.0
        %1290 = vmatpush1.msra.mxu0 0.0
        %1291 = vmatprep.subr.mxu0 0.0
        %1292 = vmatpush1.msra.mxu0 0.0
        %1293 = vmatprep.subr.mxu0 0.0
        %1294 = vmatpush1.msra.mxu0 0.0
        %1295 = vmatprep.subr.mxu0 0.0
        %1296 = vmatpush1.msra.mxu0 0.0
        %1297 = vmatprep.subr.mxu0 0.0
        %1298 = vmatpush1.msra.mxu0 0.0
        %1299 = vmatprep.subr.mxu0 0.0
        %1300 = vmatpush1.msra.mxu0 0.0
        %1301 = vmatprep.subr.mxu0 0.0
        %1302 = vmatpush1.msra.mxu0 0.0
        %1303 = vmatprep.subr.mxu0 0.0
        %1304 = vmatpush1.msra.mxu0 0.0
        %1305 = vmatprep.subr.mxu0 0.0
        %1306 = vmatpush1.msra.mxu0 0.0
        %1307 = vmatprep.subr.mxu0 0.0
        %1308 = vmatpush1.msra.mxu0 0.0
        %1309 = vmatprep.subr.mxu0 0.0
        %1310 = vmatpush1.msra.mxu0 0.0
        %1311 = vmatprep.subr.mxu0 0.0
        %1312 = vmatpush1.msra.mxu0 0.0
        %1313 = vmatprep.subr.mxu0 0.0
        %1314 = vmatpush1.msra.mxu0 0.0
        %1315 = vmatprep.subr.mxu0 0.0
        %1316 = vmatpush1.msra.mxu0 0.0
        %1317 = vmatprep.subr.mxu0 0.0
        %1318 = vmatpush1.msra.mxu0 0.0
        %1319 = vmatprep.mubr.f32.mxu0 0.0
        %1320 = vmatmul.mubr.f32.gmra.mrb[0].mxu0 %v1238
        %v1321 = vpop.f32.mrb[0].mxu0
        %v1322 = vadd.f32 0.0, %v1321
        %v1323 = vpop.f32.mrb[0].mxu0
        %v1324 = vadd.f32 0.0, %v1323
        %1325 = vmatprep.mubr.f32.mxu0 0.0
        %1326 = vmatmul.mubr.f32.gmra.mrb[0].mxu0 %v1241
        %v1327 = vpop.f32.mrb[0].mxu0
        %v1328 = vadd.f32 0.0, %v1327
        %v1329 = vpop.f32.mrb[0].mxu0
        %v1330 = vadd.f32 0.0, %v1329
        %1331 = vmatprep.mubr.f32.mxu0 0.0
        %1332 = vmatmul.mubr.f32.gmra.mrb[0].mxu0 %v1244
        %v1333 = vpop.f32.mrb[0].mxu0
        %v1334 = vadd.f32 0.0, %v1333
        %v1335 = vpop.f32.mrb[0].mxu0
        %v1336 = vadd.f32 0.0, %v1335
        %1337 = vmatprep.mubr.f32.mxu0 0.0
        %1338 = vmatmul.mubr.f32.gmra.mrb[0].mxu0 %v1247
        %v1339 = vpop.f32.mrb[0].mxu0
        %v1340 = vadd.f32 0.0, %v1339
        %v1341 = vpop.f32.mrb[0].mxu0
        %v1342 = vadd.f32 0.0, %v1341
        %1343 = vdwg.mxu0
        %v1344 = vadd.f32 %v1202, %v1322
        %v1345 = vadd.f32 %v1203, %v1324
        %v1346 = vadd.f32 %v1204, %v1328
        %v1347 = vadd.f32 %v1205, %v1330
        %v1348 = vadd.f32 %v1206, %v1334
        %v1349 = vadd.f32 %v1207, %v1336
        %v1350 = vadd.f32 %v1208, %v1340
        %v1351 = vadd.f32 %v1209, %v1342
        %1352 = vrot.lane.b32.xlu0 %v250, 111
        %v1353 = vpop.permute.xlu0 %1352
        %1354 = vrot.lane.b32.xlu0 %v252, 111
        %v1355 = vpop.permute.xlu0 %1354
        %vm1356 = vcmp.lt.s32.totalorder %v259, 111
        %v1357 = vsel %vm1356, %v1353, %v1355
        %v1358 = vsel %vm1356, %v1355, %v1353
        %s1359 = scalar_lea.vmem %s1, 16
        %v1360 = vld [vmem:[%s1359] sm:$0x3]
        %v1362 = vlaneseq
        %v1363 = vshrl.u32 %v1362, 7
        %v1364 = vsub.s32 0, %v1363
        %v1365 = vrot.slane %v1360, %v1364
        %v1366 = vlaneseq
        %v1367 = vshrl.u32 %v1366, 7
        %v1368 = vsub.s32 1, %v1367
        %v1369 = vrot.slane %v1360, %v1368
        %v1372 = vmul.f32 %v1357, %v1365
        %v1373 = vmul.f32 %v1358, %v1369
        %s1374 = scalar_lea.vmem %s2, 256
        %v1375 = vld [vmem:[%s1374] sm:$0xff]
        %v1376 = vld [vmem:[%s1374 + $0x8] sm:$0xff]
        %v1377 = vld [vmem:[%s1374 + $0x10] sm:$0xff]
        %v1378 = vld [vmem:[%s1374 + $0x18] sm:$0xff]
        %v1380 = vsel %vm308, %v1375, 0
        %v1383 = vsel %vm308, %v1376, 0
        %v1386 = vsel %vm308, %v1377, 0
        %v1389 = vsel %vm308, %v1378, 0
        %v1392 = vsel %vm321, %v1372, 0
        %v1395 = vsel %vm321, %v1373, 0
        %1397 = vmatprep.subr.mxu0 %v1395
        %1398 = vmatpush1.msra.mxu0 %v1392
        %1399 = vmatprep.subr.mxu0 0.0
        %1400 = vmatpush1.msra.mxu0 0.0
        %1401 = vmatprep.subr.mxu0 0.0
        %1402 = vmatpush1.msra.mxu0 0.0
        %1403 = vmatprep.subr.mxu0 0.0
        %1404 = vmatpush1.msra.mxu0 0.0
        %1405 = vmatprep.subr.mxu0 0.0
        %1406 = vmatpush1.msra.mxu0 0.0
        %1407 = vmatprep.subr.mxu0 0.0
        %1408 = vmatpush1.msra.mxu0 0.0
        %1409 = vmatprep.subr.mxu0 0.0
        %1410 = vmatpush1.msra.mxu0 0.0
        %1411 = vmatprep.subr.mxu0 0.0
        %1412 = vmatpush1.msra.mxu0 0.0
        %1413 = vmatprep.subr.mxu0 0.0
        %1414 = vmatpush1.msra.mxu0 0.0
        %1415 = vmatprep.subr.mxu0 0.0
        %1416 = vmatpush1.msra.mxu0 0.0
        %1417 = vmatprep.subr.mxu0 0.0
        %1418 = vmatpush1.msra.mxu0 0.0
        %1419 = vmatprep.subr.mxu0 0.0
        %1420 = vmatpush1.msra.mxu0 0.0
        %1421 = vmatprep.subr.mxu0 0.0
        %1422 = vmatpush1.msra.mxu0 0.0
        %1423 = vmatprep.subr.mxu0 0.0
        %1424 = vmatpush1.msra.mxu0 0.0
        %1425 = vmatprep.subr.mxu0 0.0
        %1426 = vmatpush1.msra.mxu0 0.0
        %1427 = vmatprep.subr.mxu0 0.0
        %1428 = vmatpush1.msra.mxu0 0.0
        %1429 = vmatprep.subr.mxu0 0.0
        %1430 = vmatpush1.msra.mxu0 0.0
        %1431 = vmatprep.subr.mxu0 0.0
        %1432 = vmatpush1.msra.mxu0 0.0
        %1433 = vmatprep.subr.mxu0 0.0
        %1434 = vmatpush1.msra.mxu0 0.0
        %1435 = vmatprep.subr.mxu0 0.0
        %1436 = vmatpush1.msra.mxu0 0.0
        %1437 = vmatprep.subr.mxu0 0.0
        %1438 = vmatpush1.msra.mxu0 0.0
        %1439 = vmatprep.subr.mxu0 0.0
        %1440 = vmatpush1.msra.mxu0 0.0
        %1441 = vmatprep.subr.mxu0 0.0
        %1442 = vmatpush1.msra.mxu0 0.0
        %1443 = vmatprep.subr.mxu0 0.0
        %1444 = vmatpush1.msra.mxu0 0.0
        %1445 = vmatprep.subr.mxu0 0.0
        %1446 = vmatpush1.msra.mxu0 0.0
        %1447 = vmatprep.subr.mxu0 0.0
        %1448 = vmatpush1.msra.mxu0 0.0
        %1449 = vmatprep.subr.mxu0 0.0
        %1450 = vmatpush1.msra.mxu0 0.0
        %1451 = vmatprep.subr.mxu0 0.0
        %1452 = vmatpush1.msra.mxu0 0.0
        %1453 = vmatprep.subr.mxu0 0.0
        %1454 = vmatpush1.msra.mxu0 0.0
        %1455 = vmatprep.subr.mxu0 0.0
        %1456 = vmatpush1.msra.mxu0 0.0
        %1457 = vmatprep.subr.mxu0 0.0
        %1458 = vmatpush1.msra.mxu0 0.0
        %1459 = vmatprep.subr.mxu0 0.0
        %1460 = vmatpush1.msra.mxu0 0.0
        %1461 = vmatprep.mubr.f32.mxu0 0.0
        %1462 = vmatmul.mubr.f32.gmra.mrb[0].mxu0 %v1380
        %v1463 = vpop.f32.mrb[0].mxu0
        %v1464 = vadd.f32 0.0, %v1463
        %v1465 = vpop.f32.mrb[0].mxu0
        %v1466 = vadd.f32 0.0, %v1465
        %1467 = vmatprep.mubr.f32.mxu0 0.0
        %1468 = vmatmul.mubr.f32.gmra.mrb[0].mxu0 %v1383
        %v1469 = vpop.f32.mrb[0].mxu0
        %v1470 = vadd.f32 0.0, %v1469
        %v1471 = vpop.f32.mrb[0].mxu0
        %v1472 = vadd.f32 0.0, %v1471
        %1473 = vmatprep.mubr.f32.mxu0 0.0
        %1474 = vmatmul.mubr.f32.gmra.mrb[0].mxu0 %v1386
        %v1475 = vpop.f32.mrb[0].mxu0
        %v1476 = vadd.f32 0.0, %v1475
        %v1477 = vpop.f32.mrb[0].mxu0
        %v1478 = vadd.f32 0.0, %v1477
        %1479 = vmatprep.mubr.f32.mxu0 0.0
        %1480 = vmatmul.mubr.f32.gmra.mrb[0].mxu0 %v1389
        %v1481 = vpop.f32.mrb[0].mxu0
        %v1482 = vadd.f32 0.0, %v1481
        %v1483 = vpop.f32.mrb[0].mxu0
        %v1484 = vadd.f32 0.0, %v1483
        %1485 = vdwg.mxu0
        %v1486 = vadd.f32 %v1344, %v1464
        %v1487 = vadd.f32 %v1345, %v1466
        %v1488 = vadd.f32 %v1346, %v1470
        %v1489 = vadd.f32 %v1347, %v1472
        %v1490 = vadd.f32 %v1348, %v1476
        %v1491 = vadd.f32 %v1349, %v1478
        %v1492 = vadd.f32 %v1350, %v1482
        %v1493 = vadd.f32 %v1351, %v1484
        %v1494 = vld [vmem:[%s3] sm:$0xff]
        %v1495 = vld [vmem:[%s3 + $0x8] sm:$0xff]
        %v1496 = vld [vmem:[%s3 + $0x10] sm:$0xff]
        %v1497 = vld [vmem:[%s3 + $0x18] sm:$0xff]
        %1499 = vset.pattern.permute.xlu0 0
        %1500 = vperm.xlu0 %1499, %v1494
        %v1501 = vpop.permute.xlu0 %1500
        %1504 = vset.pattern.permute.xlu0 0
        %1505 = vperm.xlu0 %1504, %v1495
        %v1506 = vpop.permute.xlu0 %1505
        %1509 = vset.pattern.permute.xlu0 0
        %1510 = vperm.xlu0 %1509, %v1496
        %v1511 = vpop.permute.xlu0 %1510
        %1514 = vset.pattern.permute.xlu0 0
        %1515 = vperm.xlu0 %1514, %v1497
        %v1516 = vpop.permute.xlu0 %1515
        %v1518 = vadd.f32 %v1486, %v1501
        %v1519 = vadd.f32 %v1487, %v1501
        %v1520 = vadd.f32 %v1488, %v1506
        %v1521 = vadd.f32 %v1489, %v1506
        %v1522 = vadd.f32 %v1490, %v1511
        %v1523 = vadd.f32 %v1491, %v1511
        %v1524 = vadd.f32 %v1492, %v1516
        %v1525 = vadd.f32 %v1493, %v1516
        %v1526 = vmax.f32 %v1518, 0.0
        %v1527 = vmax.f32 %v1519, 0.0
        %v1528 = vmax.f32 %v1520, 0.0
        %v1529 = vmax.f32 %v1521, 0.0
        %v1530 = vmax.f32 %v1522, 0.0
        %v1531 = vmax.f32 %v1523, 0.0
        %v1532 = vmax.f32 %v1524, 0.0
        %v1533 = vmax.f32 %v1525, 0.0
        %1534 = vrot.lane.b32.xlu0 %v1526, 17
        %v1535 = vpop.permute.xlu0 %1534
        %1536 = vrot.lane.b32.xlu0 %v1528, 17
        %v1537 = vpop.permute.xlu0 %1536
        %1538 = vrot.lane.b32.xlu0 %v1530, 17
        %v1539 = vpop.permute.xlu0 %1538
        %1540 = vrot.lane.b32.xlu0 %v1532, 17
        %v1541 = vpop.permute.xlu0 %1540
        %1542 = vrot.lane.b32.xlu0 %v1527, 17
        %v1543 = vpop.permute.xlu0 %1542
        %1544 = vrot.lane.b32.xlu0 %v1529, 17
        %v1545 = vpop.permute.xlu0 %1544
        %1546 = vrot.lane.b32.xlu0 %v1531, 17
        %v1547 = vpop.permute.xlu0 %1546
        %1548 = vrot.lane.b32.xlu0 %v1533, 17
        %v1549 = vpop.permute.xlu0 %1548
        %v1550 = vsel %vm260, %v1535, %v1543
        %v1551 = vsel %vm260, %v1537, %v1545
        %v1552 = vsel %vm260, %v1539, %v1547
        %v1553 = vsel %vm260, %v1541, %v1549
        %v1554 = vsel %vm260, %v1543, %v1535
        %v1555 = vsel %vm260, %v1545, %v1537
        %v1556 = vsel %vm260, %v1547, %v1539
        %v1557 = vsel %vm260, %v1549, %v1541
        %v1558 = vmul.f32 %v1554, %v268
        %v1559 = vmul.f32 %v1550, %v272
        %v1560 = vmul.f32 %v1555, %v268
        %v1561 = vmul.f32 %v1551, %v272
        %v1562 = vmul.f32 %v1556, %v268
        %v1563 = vmul.f32 %v1552, %v272
        %v1564 = vmul.f32 %v1557, %v268
        %v1565 = vmul.f32 %v1553, %v272
        %v1566 = vld [vmem:[%s4] sm:$0xff]
        %1567 = vrot.lane.b32.xlu0 %v1526, 16
        %v1568 = vpop.permute.xlu0 %1567
        %1569 = vrot.lane.b32.xlu0 %v1528, 16
        %v1570 = vpop.permute.xlu0 %1569
        %1571 = vrot.lane.b32.xlu0 %v1530, 16
        %v1572 = vpop.permute.xlu0 %1571
        %1573 = vrot.lane.b32.xlu0 %v1532, 16
        %v1574 = vpop.permute.xlu0 %1573
        %1575 = vrot.lane.b32.xlu0 %v1527, 16
        %v1576 = vpop.permute.xlu0 %1575
        %1577 = vrot.lane.b32.xlu0 %v1529, 16
        %v1578 = vpop.permute.xlu0 %1577
        %1579 = vrot.lane.b32.xlu0 %v1531, 16
        %v1580 = vpop.permute.xlu0 %1579
        %1581 = vrot.lane.b32.xlu0 %v1533, 16
        %v1582 = vpop.permute.xlu0 %1581
        %v1583 = vsel %vm285, %v1568, %v1576
        %v1584 = vsel %vm285, %v1570, %v1578
        %v1585 = vsel %vm285, %v1572, %v1580
        %v1586 = vsel %vm285, %v1574, %v1582
        %v1587 = vsel %vm285, %v1576, %v1568
        %v1588 = vsel %vm285, %v1578, %v1570
        %v1589 = vsel %vm285, %v1580, %v1572
        %v1590 = vsel %vm285, %v1582, %v1574
        %v1591 = vmul.f32 %v1587, %v294
        %v1592 = vmul.f32 %v1583, %v298
        %v1593 = vmul.f32 %v1588, %v294
        %v1594 = vmul.f32 %v1584, %v298
        %v1595 = vmul.f32 %v1589, %v294
        %v1596 = vmul.f32 %v1585, %v298
        %v1597 = vmul.f32 %v1590, %v294
        %v1598 = vmul.f32 %v1586, %v298
        %s1599 = scalar_lea.vmem %s4, 8
        %v1600 = vld [vmem:[%s1599] sm:$0xff]
        %vm1601 = vcmask 261120
        %v1603 = vsel %vm1601, %v1600, 0
        %1605 = vmatprep.subr.mxu0 %v1592
        %1606 = vmatpush1.msra.mxu0 %v1591
        %1607 = vmatprep.subr.mxu0 %v1594
        %1608 = vmatpush1.msra.mxu0 %v1593
        %1609 = vmatprep.subr.mxu0 %v1596
        %1610 = vmatpush1.msra.mxu0 %v1595
        %1611 = vmatprep.subr.mxu0 %v1598
        %1612 = vmatpush1.msra.mxu0 %v1597
        %1613 = vmatprep.subr.mxu0 0.0
        %1614 = vmatpush1.msra.mxu0 0.0
        %1615 = vmatprep.subr.mxu0 0.0
        %1616 = vmatpush1.msra.mxu0 0.0
        %1617 = vmatprep.subr.mxu0 0.0
        %1618 = vmatpush1.msra.mxu0 0.0
        %1619 = vmatprep.subr.mxu0 0.0
        %1620 = vmatpush1.msra.mxu0 0.0
        %1621 = vmatprep.subr.mxu0 0.0
        %1622 = vmatpush1.msra.mxu0 0.0
        %1623 = vmatprep.subr.mxu0 0.0
        %1624 = vmatpush1.msra.mxu0 0.0
        %1625 = vmatprep.subr.mxu0 0.0
        %1626 = vmatpush1.msra.mxu0 0.0
        %1627 = vmatprep.subr.mxu0 0.0
        %1628 = vmatpush1.msra.mxu0 0.0
        %1629 = vmatprep.subr.mxu0 0.0
        %1630 = vmatpush1.msra.mxu0 0.0
        %1631 = vmatprep.subr.mxu0 0.0
        %1632 = vmatpush1.msra.mxu0 0.0
        %1633 = vmatprep.subr.mxu0 0.0
        %1634 = vmatpush1.msra.mxu0 0.0
        %1635 = vmatprep.subr.mxu0 0.0
        %1636 = vmatpush1.msra.mxu0 0.0
        %1637 = vmatprep.subr.mxu0 0.0
        %1638 = vmatpush1.msra.mxu0 0.0
        %1639 = vmatprep.subr.mxu0 0.0
        %1640 = vmatpush1.msra.mxu0 0.0
        %1641 = vmatprep.subr.mxu0 0.0
        %1642 = vmatpush1.msra.mxu0 0.0
        %1643 = vmatprep.subr.mxu0 0.0
        %1644 = vmatpush1.msra.mxu0 0.0
        %1645 = vmatprep.subr.mxu0 0.0
        %1646 = vmatpush1.msra.mxu0 0.0
        %1647 = vmatprep.subr.mxu0 0.0
        %1648 = vmatpush1.msra.mxu0 0.0
        %1649 = vmatprep.subr.mxu0 0.0
        %1650 = vmatpush1.msra.mxu0 0.0
        %1651 = vmatprep.subr.mxu0 0.0
        %1652 = vmatpush1.msra.mxu0 0.0
        %1653 = vmatprep.subr.mxu0 0.0
        %1654 = vmatpush1.msra.mxu0 0.0
        %1655 = vmatprep.subr.mxu0 0.0
        %1656 = vmatpush1.msra.mxu0 0.0
        %1657 = vmatprep.subr.mxu0 0.0
        %1658 = vmatpush1.msra.mxu0 0.0
        %1659 = vmatprep.subr.mxu0 0.0
        %1660 = vmatpush1.msra.mxu0 0.0
        %1661 = vmatprep.subr.mxu0 0.0
        %1662 = vmatpush1.msra.mxu0 0.0
        %1663 = vmatprep.subr.mxu0 0.0
        %1664 = vmatpush1.msra.mxu0 0.0
        %1665 = vmatprep.subr.mxu0 0.0
        %1666 = vmatpush1.msra.mxu0 0.0
        %1667 = vmatprep.subr.mxu0 0.0
        %1668 = vmatpush1.msra.mxu0 0.0
        %1669 = vmatprep.mubr.f32.mxu0 0.0
        %1670 = vmatmul.mubr.f32.gmra.mrb[0].mxu0 %v1603
        %v1671 = vpop.f32.mrb[0].mxu0
        %v1672 = vadd.f32 0.0, %v1671
        %v1673 = vpop.f32.mrb[0].mxu0
        %v1674 = vadd.f32 0.0, %v1673
        %1675 = vdwg.mxu0
        %v1677 = vsel %vm1601, %v1566, 0
        %1679 = vmatprep.subr.mxu0 %v1559
        %1680 = vmatpush1.msra.mxu0 %v1558
        %1681 = vmatprep.subr.mxu0 %v1561
        %1682 = vmatpush1.msra.mxu0 %v1560
        %1683 = vmatprep.subr.mxu0 %v1563
        %1684 = vmatpush1.msra.mxu0 %v1562
        %1685 = vmatprep.subr.mxu0 %v1565
        %1686 = vmatpush1.msra.mxu0 %v1564
        %1687 = vmatprep.subr.mxu0 0.0
        %1688 = vmatpush1.msra.mxu0 0.0
        %1689 = vmatprep.subr.mxu0 0.0
        %1690 = vmatpush1.msra.mxu0 0.0
        %1691 = vmatprep.subr.mxu0 0.0
        %1692 = vmatpush1.msra.mxu0 0.0
        %1693 = vmatprep.subr.mxu0 0.0
        %1694 = vmatpush1.msra.mxu0 0.0
        %1695 = vmatprep.subr.mxu0 0.0
        %1696 = vmatpush1.msra.mxu0 0.0
        %1697 = vmatprep.subr.mxu0 0.0
        %1698 = vmatpush1.msra.mxu0 0.0
        %1699 = vmatprep.subr.mxu0 0.0
        %1700 = vmatpush1.msra.mxu0 0.0
        %1701 = vmatprep.subr.mxu0 0.0
        %1702 = vmatpush1.msra.mxu0 0.0
        %1703 = vmatprep.subr.mxu0 0.0
        %1704 = vmatpush1.msra.mxu0 0.0
        %1705 = vmatprep.subr.mxu0 0.0
        %1706 = vmatpush1.msra.mxu0 0.0
        %1707 = vmatprep.subr.mxu0 0.0
        %1708 = vmatpush1.msra.mxu0 0.0
        %1709 = vmatprep.subr.mxu0 0.0
        %1710 = vmatpush1.msra.mxu0 0.0
        %1711 = vmatprep.subr.mxu0 0.0
        %1712 = vmatpush1.msra.mxu0 0.0
        %1713 = vmatprep.subr.mxu0 0.0
        %1714 = vmatpush1.msra.mxu0 0.0
        %1715 = vmatprep.subr.mxu0 0.0
        %1716 = vmatpush1.msra.mxu0 0.0
        %1717 = vmatprep.subr.mxu0 0.0
        %1718 = vmatpush1.msra.mxu0 0.0
        %1719 = vmatprep.subr.mxu0 0.0
        %1720 = vmatpush1.msra.mxu0 0.0
        %1721 = vmatprep.subr.mxu0 0.0
        %1722 = vmatpush1.msra.mxu0 0.0
        %1723 = vmatprep.subr.mxu0 0.0
        %1724 = vmatpush1.msra.mxu0 0.0
        %1725 = vmatprep.subr.mxu0 0.0
        %1726 = vmatpush1.msra.mxu0 0.0
        %1727 = vmatprep.subr.mxu0 0.0
        %1728 = vmatpush1.msra.mxu0 0.0
        %1729 = vmatprep.subr.mxu0 0.0
        %1730 = vmatpush1.msra.mxu0 0.0
        %1731 = vmatprep.subr.mxu0 0.0
        %1732 = vmatpush1.msra.mxu0 0.0
        %1733 = vmatprep.subr.mxu0 0.0
        %1734 = vmatpush1.msra.mxu0 0.0
        %1735 = vmatprep.subr.mxu0 0.0
        %1736 = vmatpush1.msra.mxu0 0.0
        %1737 = vmatprep.subr.mxu0 0.0
        %1738 = vmatpush1.msra.mxu0 0.0
        %1739 = vmatprep.subr.mxu0 0.0
        %1740 = vmatpush1.msra.mxu0 0.0
        %1741 = vmatprep.subr.mxu0 0.0
        %1742 = vmatpush1.msra.mxu0 0.0
        %1743 = vmatprep.mubr.f32.mxu0 0.0
        %1744 = vmatmul.mubr.f32.gmra.mrb[0].mxu0 %v1677
        %v1745 = vpop.f32.mrb[0].mxu0
        %v1746 = vadd.f32 %v1672, %v1745
        %v1747 = vpop.f32.mrb[0].mxu0
        %v1748 = vadd.f32 %v1674, %v1747
        %1749 = vdwg.mxu0
        %1750 = vrot.lane.b32.xlu0 %v1526, 15
        %v1751 = vpop.permute.xlu0 %1750
        %1752 = vrot.lane.b32.xlu0 %v1528, 15
        %v1753 = vpop.permute.xlu0 %1752
        %1754 = vrot.lane.b32.xlu0 %v1530, 15
        %v1755 = vpop.permute.xlu0 %1754
        %1756 = vrot.lane.b32.xlu0 %v1532, 15
        %v1757 = vpop.permute.xlu0 %1756
        %1758 = vrot.lane.b32.xlu0 %v1527, 15
        %v1759 = vpop.permute.xlu0 %1758
        %1760 = vrot.lane.b32.xlu0 %v1529, 15
        %v1761 = vpop.permute.xlu0 %1760
        %1762 = vrot.lane.b32.xlu0 %v1531, 15
        %v1763 = vpop.permute.xlu0 %1762
        %1764 = vrot.lane.b32.xlu0 %v1533, 15
        %v1765 = vpop.permute.xlu0 %1764
        %v1766 = vsel %vm528, %v1751, %v1759
        %v1767 = vsel %vm528, %v1753, %v1761
        %v1768 = vsel %vm528, %v1755, %v1763
        %v1769 = vsel %vm528, %v1757, %v1765
        %v1770 = vsel %vm528, %v1759, %v1751
        %v1771 = vsel %vm528, %v1761, %v1753
        %v1772 = vsel %vm528, %v1763, %v1755
        %v1773 = vsel %vm528, %v1765, %v1757
        %v1774 = vmul.f32 %v1770, %v537
        %v1775 = vmul.f32 %v1766, %v541
        %v1776 = vmul.f32 %v1771, %v537
        %v1777 = vmul.f32 %v1767, %v541
        %v1778 = vmul.f32 %v1772, %v537
        %v1779 = vmul.f32 %v1768, %v541
        %v1780 = vmul.f32 %v1773, %v537
        %v1781 = vmul.f32 %v1769, %v541
        %s1782 = scalar_lea.vmem %s4, 16
        %v1783 = vld [vmem:[%s1782] sm:$0xff]
        %v1785 = vsel %vm1601, %v1783, 0
        %1787 = vmatprep.subr.mxu0 %v1775
        %1788 = vmatpush1.msra.mxu0 %v1774
        %1789 = vmatprep.subr.mxu0 %v1777
        %1790 = vmatpush1.msra.mxu0 %v1776
        %1791 = vmatprep.subr.mxu0 %v1779
        %1792 = vmatpush1.msra.mxu0 %v1778
        %1793 = vmatprep.subr.mxu0 %v1781
        %1794 = vmatpush1.msra.mxu0 %v1780
        %1795 = vmatprep.subr.mxu0 0.0
        %1796 = vmatpush1.msra.mxu0 0.0
        %1797 = vmatprep.subr.mxu0 0.0
        %1798 = vmatpush1.msra.mxu0 0.0
        %1799 = vmatprep.subr.mxu0 0.0
        %1800 = vmatpush1.msra.mxu0 0.0
        %1801 = vmatprep.subr.mxu0 0.0
        %1802 = vmatpush1.msra.mxu0 0.0
        %1803 = vmatprep.subr.mxu0 0.0
        %1804 = vmatpush1.msra.mxu0 0.0
        %1805 = vmatprep.subr.mxu0 0.0
        %1806 = vmatpush1.msra.mxu0 0.0
        %1807 = vmatprep.subr.mxu0 0.0
        %1808 = vmatpush1.msra.mxu0 0.0
        %1809 = vmatprep.subr.mxu0 0.0
        %1810 = vmatpush1.msra.mxu0 0.0
        %1811 = vmatprep.subr.mxu0 0.0
        %1812 = vmatpush1.msra.mxu0 0.0
        %1813 = vmatprep.subr.mxu0 0.0
        %1814 = vmatpush1.msra.mxu0 0.0
        %1815 = vmatprep.subr.mxu0 0.0
        %1816 = vmatpush1.msra.mxu0 0.0
        %1817 = vmatprep.subr.mxu0 0.0
        %1818 = vmatpush1.msra.mxu0 0.0
        %1819 = vmatprep.subr.mxu0 0.0
        %1820 = vmatpush1.msra.mxu0 0.0
        %1821 = vmatprep.subr.mxu0 0.0
        %1822 = vmatpush1.msra.mxu0 0.0
        %1823 = vmatprep.subr.mxu0 0.0
        %1824 = vmatpush1.msra.mxu0 0.0
        %1825 = vmatprep.subr.mxu0 0.0
        %1826 = vmatpush1.msra.mxu0 0.0
        %1827 = vmatprep.subr.mxu0 0.0
        %1828 = vmatpush1.msra.mxu0 0.0
        %1829 = vmatprep.subr.mxu0 0.0
        %1830 = vmatpush1.msra.mxu0 0.0
        %1831 = vmatprep.subr.mxu0 0.0
        %1832 = vmatpush1.msra.mxu0 0.0
        %1833 = vmatprep.subr.mxu0 0.0
        %1834 = vmatpush1.msra.mxu0 0.0
        %1835 = vmatprep.subr.mxu0 0.0
        %1836 = vmatpush1.msra.mxu0 0.0
        %1837 = vmatprep.subr.mxu0 0.0
        %1838 = vmatpush1.msra.mxu0 0.0
        %1839 = vmatprep.subr.mxu0 0.0
        %1840 = vmatpush1.msra.mxu0 0.0
        %1841 = vmatprep.subr.mxu0 0.0
        %1842 = vmatpush1.msra.mxu0 0.0
        %1843 = vmatprep.subr.mxu0 0.0
        %1844 = vmatpush1.msra.mxu0 0.0
        %1845 = vmatprep.subr.mxu0 0.0
        %1846 = vmatpush1.msra.mxu0 0.0
        %1847 = vmatprep.subr.mxu0 0.0
        %1848 = vmatpush1.msra.mxu0 0.0
        %1849 = vmatprep.subr.mxu0 0.0
        %1850 = vmatpush1.msra.mxu0 0.0
        %1851 = vmatprep.mubr.f32.mxu0 0.0
        %1852 = vmatmul.mubr.f32.gmra.mrb[0].mxu0 %v1785
        %v1853 = vpop.f32.mrb[0].mxu0
        %v1854 = vadd.f32 0.0, %v1853
        %v1855 = vpop.f32.mrb[0].mxu0
        %v1856 = vadd.f32 0.0, %v1855
        %1857 = vdwg.mxu0
        %v1858 = vadd.f32 %v1746, %v1854
        %v1859 = vadd.f32 %v1748, %v1856
        %1860 = vrot.lane.b32.xlu0 %v1526, 1
        %v1861 = vpop.permute.xlu0 %1860
        %1862 = vrot.lane.b32.xlu0 %v1528, 1
        %v1863 = vpop.permute.xlu0 %1862
        %1864 = vrot.lane.b32.xlu0 %v1530, 1
        %v1865 = vpop.permute.xlu0 %1864
        %1866 = vrot.lane.b32.xlu0 %v1532, 1
        %v1867 = vpop.permute.xlu0 %1866
        %1868 = vrot.lane.b32.xlu0 %v1527, 1
        %v1869 = vpop.permute.xlu0 %1868
        %1870 = vrot.lane.b32.xlu0 %v1529, 1
        %v1871 = vpop.permute.xlu0 %1870
        %1872 = vrot.lane.b32.xlu0 %v1531, 1
        %v1873 = vpop.permute.xlu0 %1872
        %1874 = vrot.lane.b32.xlu0 %v1533, 1
        %v1875 = vpop.permute.xlu0 %1874
        %v1876 = vsel %vm670, %v1861, %v1869
        %v1877 = vsel %vm670, %v1863, %v1871
        %v1878 = vsel %vm670, %v1865, %v1873
        %v1879 = vsel %vm670, %v1867, %v1875
        %v1880 = vsel %vm670, %v1869, %v1861
        %v1881 = vsel %vm670, %v1871, %v1863
        %v1882 = vsel %vm670, %v1873, %v1865
        %v1883 = vsel %vm670, %v1875, %v1867
        %v1884 = vmul.f32 %v1880, %v679
        %v1885 = vmul.f32 %v1876, %v683
        %v1886 = vmul.f32 %v1881, %v679
        %v1887 = vmul.f32 %v1877, %v683
        %v1888 = vmul.f32 %v1882, %v679
        %v1889 = vmul.f32 %v1878, %v683
        %v1890 = vmul.f32 %v1883, %v679
        %v1891 = vmul.f32 %v1879, %v683
        %s1892 = scalar_lea.vmem %s4, 24
        %v1893 = vld [vmem:[%s1892] sm:$0xff]
        %v1895 = vsel %vm1601, %v1893, 0
        %1897 = vmatprep.subr.mxu0 %v1885
        %1898 = vmatpush1.msra.mxu0 %v1884
        %1899 = vmatprep.subr.mxu0 %v1887
        %1900 = vmatpush1.msra.mxu0 %v1886
        %1901 = vmatprep.subr.mxu0 %v1889
        %1902 = vmatpush1.msra.mxu0 %v1888
        %1903 = vmatprep.subr.mxu0 %v1891
        %1904 = vmatpush1.msra.mxu0 %v1890
        %1905 = vmatprep.subr.mxu0 0.0
        %1906 = vmatpush1.msra.mxu0 0.0
        %1907 = vmatprep.subr.mxu0 0.0
        %1908 = vmatpush1.msra.mxu0 0.0
        %1909 = vmatprep.subr.mxu0 0.0
        %1910 = vmatpush1.msra.mxu0 0.0
        %1911 = vmatprep.subr.mxu0 0.0
        %1912 = vmatpush1.msra.mxu0 0.0
        %1913 = vmatprep.subr.mxu0 0.0
        %1914 = vmatpush1.msra.mxu0 0.0
        %1915 = vmatprep.subr.mxu0 0.0
        %1916 = vmatpush1.msra.mxu0 0.0
        %1917 = vmatprep.subr.mxu0 0.0
        %1918 = vmatpush1.msra.mxu0 0.0
        %1919 = vmatprep.subr.mxu0 0.0
        %1920 = vmatpush1.msra.mxu0 0.0
        %1921 = vmatprep.subr.mxu0 0.0
        %1922 = vmatpush1.msra.mxu0 0.0
        %1923 = vmatprep.subr.mxu0 0.0
        %1924 = vmatpush1.msra.mxu0 0.0
        %1925 = vmatprep.subr.mxu0 0.0
        %1926 = vmatpush1.msra.mxu0 0.0
        %1927 = vmatprep.subr.mxu0 0.0
        %1928 = vmatpush1.msra.mxu0 0.0
        %1929 = vmatprep.subr.mxu0 0.0
        %1930 = vmatpush1.msra.mxu0 0.0
        %1931 = vmatprep.subr.mxu0 0.0
        %1932 = vmatpush1.msra.mxu0 0.0
        %1933 = vmatprep.subr.mxu0 0.0
        %1934 = vmatpush1.msra.mxu0 0.0
        %1935 = vmatprep.subr.mxu0 0.0
        %1936 = vmatpush1.msra.mxu0 0.0
        %1937 = vmatprep.subr.mxu0 0.0
        %1938 = vmatpush1.msra.mxu0 0.0
        %1939 = vmatprep.subr.mxu0 0.0
        %1940 = vmatpush1.msra.mxu0 0.0
        %1941 = vmatprep.subr.mxu0 0.0
        %1942 = vmatpush1.msra.mxu0 0.0
        %1943 = vmatprep.subr.mxu0 0.0
        %1944 = vmatpush1.msra.mxu0 0.0
        %1945 = vmatprep.subr.mxu0 0.0
        %1946 = vmatpush1.msra.mxu0 0.0
        %1947 = vmatprep.subr.mxu0 0.0
        %1948 = vmatpush1.msra.mxu0 0.0
        %1949 = vmatprep.subr.mxu0 0.0
        %1950 = vmatpush1.msra.mxu0 0.0
        %1951 = vmatprep.subr.mxu0 0.0
        %1952 = vmatpush1.msra.mxu0 0.0
        %1953 = vmatprep.subr.mxu0 0.0
        %1954 = vmatpush1.msra.mxu0 0.0
        %1955 = vmatprep.subr.mxu0 0.0
        %1956 = vmatpush1.msra.mxu0 0.0
        %1957 = vmatprep.subr.mxu0 0.0
        %1958 = vmatpush1.msra.mxu0 0.0
        %1959 = vmatprep.subr.mxu0 0.0
        %1960 = vmatpush1.msra.mxu0 0.0
        %1961 = vmatprep.mubr.f32.mxu0 0.0
        %1962 = vmatmul.mubr.f32.gmra.mrb[0].mxu0 %v1895
        %v1963 = vpop.f32.mrb[0].mxu0
        %v1964 = vadd.f32 0.0, %v1963
        %v1965 = vpop.f32.mrb[0].mxu0
        %v1966 = vadd.f32 0.0, %v1965
        %1967 = vdwg.mxu0
        %v1968 = vadd.f32 %v1858, %v1964
        %v1969 = vadd.f32 %v1859, %v1966
        %s1970 = scalar_lea.vmem %s4, 32
        %v1971 = vld [vmem:[%s1970] sm:$0xff]
        %v1973 = vsel %vm1601, %v1971, 0
        %1975 = vmatprep.subr.mxu0 %v1527
        %1976 = vmatpush1.msra.mxu0 %v1526
        %1977 = vmatprep.subr.mxu0 %v1529
        %1978 = vmatpush1.msra.mxu0 %v1528
        %1979 = vmatprep.subr.mxu0 %v1531
        %1980 = vmatpush1.msra.mxu0 %v1530
        %1981 = vmatprep.subr.mxu0 %v1533
        %1982 = vmatpush1.msra.mxu0 %v1532
        %1983 = vmatprep.subr.mxu0 0.0
        %1984 = vmatpush1.msra.mxu0 0.0
        %1985 = vmatprep.subr.mxu0 0.0
        %1986 = vmatpush1.msra.mxu0 0.0
        %1987 = vmatprep.subr.mxu0 0.0
        %1988 = vmatpush1.msra.mxu0 0.0
        %1989 = vmatprep.subr.mxu0 0.0
        %1990 = vmatpush1.msra.mxu0 0.0
        %1991 = vmatprep.subr.mxu0 0.0
        %1992 = vmatpush1.msra.mxu0 0.0
        %1993 = vmatprep.subr.mxu0 0.0
        %1994 = vmatpush1.msra.mxu0 0.0
        %1995 = vmatprep.subr.mxu0 0.0
        %1996 = vmatpush1.msra.mxu0 0.0
        %1997 = vmatprep.subr.mxu0 0.0
        %1998 = vmatpush1.msra.mxu0 0.0
        %1999 = vmatprep.subr.mxu0 0.0
        %2000 = vmatpush1.msra.mxu0 0.0
        %2001 = vmatprep.subr.mxu0 0.0
        %2002 = vmatpush1.msra.mxu0 0.0
        %2003 = vmatprep.subr.mxu0 0.0
        %2004 = vmatpush1.msra.mxu0 0.0
        %2005 = vmatprep.subr.mxu0 0.0
        %2006 = vmatpush1.msra.mxu0 0.0
        %2007 = vmatprep.subr.mxu0 0.0
        %2008 = vmatpush1.msra.mxu0 0.0
        %2009 = vmatprep.subr.mxu0 0.0
        %2010 = vmatpush1.msra.mxu0 0.0
        %2011 = vmatprep.subr.mxu0 0.0
        %2012 = vmatpush1.msra.mxu0 0.0
        %2013 = vmatprep.subr.mxu0 0.0
        %2014 = vmatpush1.msra.mxu0 0.0
        %2015 = vmatprep.subr.mxu0 0.0
        %2016 = vmatpush1.msra.mxu0 0.0
        %2017 = vmatprep.subr.mxu0 0.0
        %2018 = vmatpush1.msra.mxu0 0.0
        %2019 = vmatprep.subr.mxu0 0.0
        %2020 = vmatpush1.msra.mxu0 0.0
        %2021 = vmatprep.subr.mxu0 0.0
        %2022 = vmatpush1.msra.mxu0 0.0
        %2023 = vmatprep.subr.mxu0 0.0
        %2024 = vmatpush1.msra.mxu0 0.0
        %2025 = vmatprep.subr.mxu0 0.0
        %2026 = vmatpush1.msra.mxu0 0.0
        %2027 = vmatprep.subr.mxu0 0.0
        %2028 = vmatpush1.msra.mxu0 0.0
        %2029 = vmatprep.subr.mxu0 0.0
        %2030 = vmatpush1.msra.mxu0 0.0
        %2031 = vmatprep.subr.mxu0 0.0
        %2032 = vmatpush1.msra.mxu0 0.0
        %2033 = vmatprep.subr.mxu0 0.0
        %2034 = vmatpush1.msra.mxu0 0.0
        %2035 = vmatprep.subr.mxu0 0.0
        %2036 = vmatpush1.msra.mxu0 0.0
        %2037 = vmatprep.subr.mxu0 0.0
        %2038 = vmatpush1.msra.mxu0 0.0
        %2039 = vmatprep.mubr.f32.mxu0 0.0
        %2040 = vmatmul.mubr.f32.gmra.mrb[0].mxu0 %v1973
        %v2041 = vpop.f32.mrb[0].mxu0
        %v2042 = vadd.f32 0.0, %v2041
        %v2043 = vpop.f32.mrb[0].mxu0
        %v2044 = vadd.f32 0.0, %v2043
        %2045 = vdwg.mxu0
        %v2046 = vadd.f32 %v1968, %v2042
        %v2047 = vadd.f32 %v1969, %v2044
        %2048 = vrot.lane.b32.xlu0 %v1526, 127
        %v2049 = vpop.permute.xlu0 %2048
        %2050 = vrot.lane.b32.xlu0 %v1528, 127
        %v2051 = vpop.permute.xlu0 %2050
        %2052 = vrot.lane.b32.xlu0 %v1530, 127
        %v2053 = vpop.permute.xlu0 %2052
        %2054 = vrot.lane.b32.xlu0 %v1532, 127
        %v2055 = vpop.permute.xlu0 %2054
        %2056 = vrot.lane.b32.xlu0 %v1527, 127
        %v2057 = vpop.permute.xlu0 %2056
        %2058 = vrot.lane.b32.xlu0 %v1529, 127
        %v2059 = vpop.permute.xlu0 %2058
        %2060 = vrot.lane.b32.xlu0 %v1531, 127
        %v2061 = vpop.permute.xlu0 %2060
        %2062 = vrot.lane.b32.xlu0 %v1533, 127
        %v2063 = vpop.permute.xlu0 %2062
        %v2064 = vsel %vm930, %v2049, %v2057
        %v2065 = vsel %vm930, %v2051, %v2059
        %v2066 = vsel %vm930, %v2053, %v2061
        %v2067 = vsel %vm930, %v2055, %v2063
        %v2068 = vsel %vm930, %v2057, %v2049
        %v2069 = vsel %vm930, %v2059, %v2051
        %v2070 = vsel %vm930, %v2061, %v2053
        %v2071 = vsel %vm930, %v2063, %v2055
        %v2072 = vmul.f32 %v2064, %v939
        %v2073 = vmul.f32 %v2068, %v943
        %v2074 = vmul.f32 %v2065, %v939
        %v2075 = vmul.f32 %v2069, %v943
        %v2076 = vmul.f32 %v2066, %v939
        %v2077 = vmul.f32 %v2070, %v943
        %v2078 = vmul.f32 %v2067, %v939
        %v2079 = vmul.f32 %v2071, %v943
        %s2080 = scalar_lea.vmem %s4, 40
        %v2081 = vld [vmem:[%s2080] sm:$0xff]
        %v2083 = vsel %vm1601, %v2081, 0
        %2085 = vmatprep.subr.mxu0 %v2073
        %2086 = vmatpush1.msra.mxu0 %v2072
        %2087 = vmatprep.subr.mxu0 %v2075
        %2088 = vmatpush1.msra.mxu0 %v2074
        %2089 = vmatprep.subr.mxu0 %v2077
        %2090 = vmatpush1.msra.mxu0 %v2076
        %2091 = vmatprep.subr.mxu0 %v2079
        %2092 = vmatpush1.msra.mxu0 %v2078
        %2093 = vmatprep.subr.mxu0 0.0
        %2094 = vmatpush1.msra.mxu0 0.0
        %2095 = vmatprep.subr.mxu0 0.0
        %2096 = vmatpush1.msra.mxu0 0.0
        %2097 = vmatprep.subr.mxu0 0.0
        %2098 = vmatpush1.msra.mxu0 0.0
        %2099 = vmatprep.subr.mxu0 0.0
        %2100 = vmatpush1.msra.mxu0 0.0
        %2101 = vmatprep.subr.mxu0 0.0
        %2102 = vmatpush1.msra.mxu0 0.0
        %2103 = vmatprep.subr.mxu0 0.0
        %2104 = vmatpush1.msra.mxu0 0.0
        %2105 = vmatprep.subr.mxu0 0.0
        %2106 = vmatpush1.msra.mxu0 0.0
        %2107 = vmatprep.subr.mxu0 0.0
        %2108 = vmatpush1.msra.mxu0 0.0
        %2109 = vmatprep.subr.mxu0 0.0
        %2110 = vmatpush1.msra.mxu0 0.0
        %2111 = vmatprep.subr.mxu0 0.0
        %2112 = vmatpush1.msra.mxu0 0.0
        %2113 = vmatprep.subr.mxu0 0.0
        %2114 = vmatpush1.msra.mxu0 0.0
        %2115 = vmatprep.subr.mxu0 0.0
        %2116 = vmatpush1.msra.mxu0 0.0
        %2117 = vmatprep.subr.mxu0 0.0
        %2118 = vmatpush1.msra.mxu0 0.0
        %2119 = vmatprep.subr.mxu0 0.0
        %2120 = vmatpush1.msra.mxu0 0.0
        %2121 = vmatprep.subr.mxu0 0.0
        %2122 = vmatpush1.msra.mxu0 0.0
        %2123 = vmatprep.subr.mxu0 0.0
        %2124 = vmatpush1.msra.mxu0 0.0
        %2125 = vmatprep.subr.mxu0 0.0
        %2126 = vmatpush1.msra.mxu0 0.0
        %2127 = vmatprep.subr.mxu0 0.0
        %2128 = vmatpush1.msra.mxu0 0.0
        %2129 = vmatprep.subr.mxu0 0.0
        %2130 = vmatpush1.msra.mxu0 0.0
        %2131 = vmatprep.subr.mxu0 0.0
        %2132 = vmatpush1.msra.mxu0 0.0
        %2133 = vmatprep.subr.mxu0 0.0
        %2134 = vmatpush1.msra.mxu0 0.0
        %2135 = vmatprep.subr.mxu0 0.0
        %2136 = vmatpush1.msra.mxu0 0.0
        %2137 = vmatprep.subr.mxu0 0.0
        %2138 = vmatpush1.msra.mxu0 0.0
        %2139 = vmatprep.subr.mxu0 0.0
        %2140 = vmatpush1.msra.mxu0 0.0
        %2141 = vmatprep.subr.mxu0 0.0
        %2142 = vmatpush1.msra.mxu0 0.0
        %2143 = vmatprep.subr.mxu0 0.0
        %2144 = vmatpush1.msra.mxu0 0.0
        %2145 = vmatprep.subr.mxu0 0.0
        %2146 = vmatpush1.msra.mxu0 0.0
        %2147 = vmatprep.subr.mxu0 0.0
        %2148 = vmatpush1.msra.mxu0 0.0
        %2149 = vmatprep.mubr.f32.mxu0 0.0
        %2150 = vmatmul.mubr.f32.gmra.mrb[0].mxu0 %v2083
        %v2151 = vpop.f32.mrb[0].mxu0
        %v2152 = vadd.f32 0.0, %v2151
        %v2153 = vpop.f32.mrb[0].mxu0
        %v2154 = vadd.f32 0.0, %v2153
        %2155 = vdwg.mxu0
        %v2156 = vadd.f32 %v2046, %v2152
        %v2157 = vadd.f32 %v2047, %v2154
        %2158 = vrot.lane.b32.xlu0 %v1526, 113
        %v2159 = vpop.permute.xlu0 %2158
        %2160 = vrot.lane.b32.xlu0 %v1528, 113
        %v2161 = vpop.permute.xlu0 %2160
        %2162 = vrot.lane.b32.xlu0 %v1530, 113
        %v2163 = vpop.permute.xlu0 %2162
        %2164 = vrot.lane.b32.xlu0 %v1532, 113
        %v2165 = vpop.permute.xlu0 %2164
        %2166 = vrot.lane.b32.xlu0 %v1527, 113
        %v2167 = vpop.permute.xlu0 %2166
        %2168 = vrot.lane.b32.xlu0 %v1529, 113
        %v2169 = vpop.permute.xlu0 %2168
        %2170 = vrot.lane.b32.xlu0 %v1531, 113
        %v2171 = vpop.permute.xlu0 %2170
        %2172 = vrot.lane.b32.xlu0 %v1533, 113
        %v2173 = vpop.permute.xlu0 %2172
        %v2174 = vsel %vm1072, %v2159, %v2167
        %v2175 = vsel %vm1072, %v2161, %v2169
        %v2176 = vsel %vm1072, %v2163, %v2171
        %v2177 = vsel %vm1072, %v2165, %v2173
        %v2178 = vsel %vm1072, %v2167, %v2159
        %v2179 = vsel %vm1072, %v2169, %v2161
        %v2180 = vsel %vm1072, %v2171, %v2163
        %v2181 = vsel %vm1072, %v2173, %v2165
        %v2182 = vmul.f32 %v2174, %v1081
        %v2183 = vmul.f32 %v2178, %v1085
        %v2184 = vmul.f32 %v2175, %v1081
        %v2185 = vmul.f32 %v2179, %v1085
        %v2186 = vmul.f32 %v2176, %v1081
        %v2187 = vmul.f32 %v2180, %v1085
        %v2188 = vmul.f32 %v2177, %v1081
        %v2189 = vmul.f32 %v2181, %v1085
        %s2190 = scalar_lea.vmem %s4, 48
        %v2191 = vld [vmem:[%s2190] sm:$0xff]
        %v2193 = vsel %vm1601, %v2191, 0
        %2195 = vmatprep.subr.mxu0 %v2183
        %2196 = vmatpush1.msra.mxu0 %v2182
        %2197 = vmatprep.subr.mxu0 %v2185
        %2198 = vmatpush1.msra.mxu0 %v2184
        %2199 = vmatprep.subr.mxu0 %v2187
        %2200 = vmatpush1.msra.mxu0 %v2186
        %2201 = vmatprep.subr.mxu0 %v2189
        %2202 = vmatpush1.msra.mxu0 %v2188
        %2203 = vmatprep.subr.mxu0 0.0
        %2204 = vmatpush1.msra.mxu0 0.0
        %2205 = vmatprep.subr.mxu0 0.0
        %2206 = vmatpush1.msra.mxu0 0.0
        %2207 = vmatprep.subr.mxu0 0.0
        %2208 = vmatpush1.msra.mxu0 0.0
        %2209 = vmatprep.subr.mxu0 0.0
        %2210 = vmatpush1.msra.mxu0 0.0
        %2211 = vmatprep.subr.mxu0 0.0
        %2212 = vmatpush1.msra.mxu0 0.0
        %2213 = vmatprep.subr.mxu0 0.0
        %2214 = vmatpush1.msra.mxu0 0.0
        %2215 = vmatprep.subr.mxu0 0.0
        %2216 = vmatpush1.msra.mxu0 0.0
        %2217 = vmatprep.subr.mxu0 0.0
        %2218 = vmatpush1.msra.mxu0 0.0
        %2219 = vmatprep.subr.mxu0 0.0
        %2220 = vmatpush1.msra.mxu0 0.0
        %2221 = vmatprep.subr.mxu0 0.0
        %2222 = vmatpush1.msra.mxu0 0.0
        %2223 = vmatprep.subr.mxu0 0.0
        %2224 = vmatpush1.msra.mxu0 0.0
        %2225 = vmatprep.subr.mxu0 0.0
        %2226 = vmatpush1.msra.mxu0 0.0
        %2227 = vmatprep.subr.mxu0 0.0
        %2228 = vmatpush1.msra.mxu0 0.0
        %2229 = vmatprep.subr.mxu0 0.0
        %2230 = vmatpush1.msra.mxu0 0.0
        %2231 = vmatprep.subr.mxu0 0.0
        %2232 = vmatpush1.msra.mxu0 0.0
        %2233 = vmatprep.subr.mxu0 0.0
        %2234 = vmatpush1.msra.mxu0 0.0
        %2235 = vmatprep.subr.mxu0 0.0
        %2236 = vmatpush1.msra.mxu0 0.0
        %2237 = vmatprep.subr.mxu0 0.0
        %2238 = vmatpush1.msra.mxu0 0.0
        %2239 = vmatprep.subr.mxu0 0.0
        %2240 = vmatpush1.msra.mxu0 0.0
        %2241 = vmatprep.subr.mxu0 0.0
        %2242 = vmatpush1.msra.mxu0 0.0
        %2243 = vmatprep.subr.mxu0 0.0
        %2244 = vmatpush1.msra.mxu0 0.0
        %2245 = vmatprep.subr.mxu0 0.0
        %2246 = vmatpush1.msra.mxu0 0.0
        %2247 = vmatprep.subr.mxu0 0.0
        %2248 = vmatpush1.msra.mxu0 0.0
        %2249 = vmatprep.subr.mxu0 0.0
        %2250 = vmatpush1.msra.mxu0 0.0
        %2251 = vmatprep.subr.mxu0 0.0
        %2252 = vmatpush1.msra.mxu0 0.0
        %2253 = vmatprep.subr.mxu0 0.0
        %2254 = vmatpush1.msra.mxu0 0.0
        %2255 = vmatprep.subr.mxu0 0.0
        %2256 = vmatpush1.msra.mxu0 0.0
        %2257 = vmatprep.subr.mxu0 0.0
        %2258 = vmatpush1.msra.mxu0 0.0
        %2259 = vmatprep.mubr.f32.mxu0 0.0
        %2260 = vmatmul.mubr.f32.gmra.mrb[0].mxu0 %v2193
        %v2261 = vpop.f32.mrb[0].mxu0
        %v2262 = vadd.f32 0.0, %v2261
        %v2263 = vpop.f32.mrb[0].mxu0
        %v2264 = vadd.f32 0.0, %v2263
        %2265 = vdwg.mxu0
        %v2266 = vadd.f32 %v2156, %v2262
        %v2267 = vadd.f32 %v2157, %v2264
        %2268 = vrot.lane.b32.xlu0 %v1526, 112
        %v2269 = vpop.permute.xlu0 %2268
        %2270 = vrot.lane.b32.xlu0 %v1528, 112
        %v2271 = vpop.permute.xlu0 %2270
        %2272 = vrot.lane.b32.xlu0 %v1530, 112
        %v2273 = vpop.permute.xlu0 %2272
        %2274 = vrot.lane.b32.xlu0 %v1532, 112
        %v2275 = vpop.permute.xlu0 %2274
        %2276 = vrot.lane.b32.xlu0 %v1527, 112
        %v2277 = vpop.permute.xlu0 %2276
        %2278 = vrot.lane.b32.xlu0 %v1529, 112
        %v2279 = vpop.permute.xlu0 %2278
        %2280 = vrot.lane.b32.xlu0 %v1531, 112
        %v2281 = vpop.permute.xlu0 %2280
        %2282 = vrot.lane.b32.xlu0 %v1533, 112
        %v2283 = vpop.permute.xlu0 %2282
        %v2284 = vsel %vm1214, %v2269, %v2277
        %v2285 = vsel %vm1214, %v2271, %v2279
        %v2286 = vsel %vm1214, %v2273, %v2281
        %v2287 = vsel %vm1214, %v2275, %v2283
        %v2288 = vsel %vm1214, %v2277, %v2269
        %v2289 = vsel %vm1214, %v2279, %v2271
        %v2290 = vsel %vm1214, %v2281, %v2273
        %v2291 = vsel %vm1214, %v2283, %v2275
        %v2292 = vmul.f32 %v2284, %v1223
        %v2293 = vmul.f32 %v2288, %v1227
        %v2294 = vmul.f32 %v2285, %v1223
        %v2295 = vmul.f32 %v2289, %v1227
        %v2296 = vmul.f32 %v2286, %v1223
        %v2297 = vmul.f32 %v2290, %v1227
        %v2298 = vmul.f32 %v2287, %v1223
        %v2299 = vmul.f32 %v2291, %v1227
        %s2300 = scalar_lea.vmem %s4, 56
        %v2301 = vld [vmem:[%s2300] sm:$0xff]
        %v2303 = vsel %vm1601, %v2301, 0
        %2305 = vmatprep.subr.mxu0 %v2293
        %2306 = vmatpush1.msra.mxu0 %v2292
        %2307 = vmatprep.subr.mxu0 %v2295
        %2308 = vmatpush1.msra.mxu0 %v2294
        %2309 = vmatprep.subr.mxu0 %v2297
        %2310 = vmatpush1.msra.mxu0 %v2296
        %2311 = vmatprep.subr.mxu0 %v2299
        %2312 = vmatpush1.msra.mxu0 %v2298
        %2313 = vmatprep.subr.mxu0 0.0
        %2314 = vmatpush1.msra.mxu0 0.0
        %2315 = vmatprep.subr.mxu0 0.0
        %2316 = vmatpush1.msra.mxu0 0.0
        %2317 = vmatprep.subr.mxu0 0.0
        %2318 = vmatpush1.msra.mxu0 0.0
        %2319 = vmatprep.subr.mxu0 0.0
        %2320 = vmatpush1.msra.mxu0 0.0
        %2321 = vmatprep.subr.mxu0 0.0
        %2322 = vmatpush1.msra.mxu0 0.0
        %2323 = vmatprep.subr.mxu0 0.0
        %2324 = vmatpush1.msra.mxu0 0.0
        %2325 = vmatprep.subr.mxu0 0.0
        %2326 = vmatpush1.msra.mxu0 0.0
        %2327 = vmatprep.subr.mxu0 0.0
        %2328 = vmatpush1.msra.mxu0 0.0
        %2329 = vmatprep.subr.mxu0 0.0
        %2330 = vmatpush1.msra.mxu0 0.0
        %2331 = vmatprep.subr.mxu0 0.0
        %2332 = vmatpush1.msra.mxu0 0.0
        %2333 = vmatprep.subr.mxu0 0.0
        %2334 = vmatpush1.msra.mxu0 0.0
        %2335 = vmatprep.subr.mxu0 0.0
        %2336 = vmatpush1.msra.mxu0 0.0
        %2337 = vmatprep.subr.mxu0 0.0
        %2338 = vmatpush1.msra.mxu0 0.0
        %2339 = vmatprep.subr.mxu0 0.0
        %2340 = vmatpush1.msra.mxu0 0.0
        %2341 = vmatprep.subr.mxu0 0.0
        %2342 = vmatpush1.msra.mxu0 0.0
        %2343 = vmatprep.subr.mxu0 0.0
        %2344 = vmatpush1.msra.mxu0 0.0
        %2345 = vmatprep.subr.mxu0 0.0
        %2346 = vmatpush1.msra.mxu0 0.0
        %2347 = vmatprep.subr.mxu0 0.0
        %2348 = vmatpush1.msra.mxu0 0.0
        %2349 = vmatprep.subr.mxu0 0.0
        %2350 = vmatpush1.msra.mxu0 0.0
        %2351 = vmatprep.subr.mxu0 0.0
        %2352 = vmatpush1.msra.mxu0 0.0
        %2353 = vmatprep.subr.mxu0 0.0
        %2354 = vmatpush1.msra.mxu0 0.0
        %2355 = vmatprep.subr.mxu0 0.0
        %2356 = vmatpush1.msra.mxu0 0.0
        %2357 = vmatprep.subr.mxu0 0.0
        %2358 = vmatpush1.msra.mxu0 0.0
        %2359 = vmatprep.subr.mxu0 0.0
        %2360 = vmatpush1.msra.mxu0 0.0
        %2361 = vmatprep.subr.mxu0 0.0
        %2362 = vmatpush1.msra.mxu0 0.0
        %2363 = vmatprep.subr.mxu0 0.0
        %2364 = vmatpush1.msra.mxu0 0.0
        %2365 = vmatprep.subr.mxu0 0.0
        %2366 = vmatpush1.msra.mxu0 0.0
        %2367 = vmatprep.subr.mxu0 0.0
        %2368 = vmatpush1.msra.mxu0 0.0
        %2369 = vmatprep.mubr.f32.mxu0 0.0
        %2370 = vmatmul.mubr.f32.gmra.mrb[0].mxu0 %v2303
        %v2371 = vpop.f32.mrb[0].mxu0
        %v2372 = vadd.f32 0.0, %v2371
        %v2373 = vpop.f32.mrb[0].mxu0
        %v2374 = vadd.f32 0.0, %v2373
        %2375 = vdwg.mxu0
        %v2376 = vadd.f32 %v2266, %v2372
        %v2377 = vadd.f32 %v2267, %v2374
        %2378 = vrot.lane.b32.xlu0 %v1526, 111
        %v2379 = vpop.permute.xlu0 %2378
        %2380 = vrot.lane.b32.xlu0 %v1528, 111
        %v2381 = vpop.permute.xlu0 %2380
        %2382 = vrot.lane.b32.xlu0 %v1530, 111
        %v2383 = vpop.permute.xlu0 %2382
        %2384 = vrot.lane.b32.xlu0 %v1532, 111
        %v2385 = vpop.permute.xlu0 %2384
        %2386 = vrot.lane.b32.xlu0 %v1527, 111
        %v2387 = vpop.permute.xlu0 %2386
        %2388 = vrot.lane.b32.xlu0 %v1529, 111
        %v2389 = vpop.permute.xlu0 %2388
        %2390 = vrot.lane.b32.xlu0 %v1531, 111
        %v2391 = vpop.permute.xlu0 %2390
        %2392 = vrot.lane.b32.xlu0 %v1533, 111
        %v2393 = vpop.permute.xlu0 %2392
        %v2394 = vsel %vm1356, %v2379, %v2387
        %v2395 = vsel %vm1356, %v2381, %v2389
        %v2396 = vsel %vm1356, %v2383, %v2391
        %v2397 = vsel %vm1356, %v2385, %v2393
        %v2398 = vsel %vm1356, %v2387, %v2379
        %v2399 = vsel %vm1356, %v2389, %v2381
        %v2400 = vsel %vm1356, %v2391, %v2383
        %v2401 = vsel %vm1356, %v2393, %v2385
        %v2402 = vmul.f32 %v2394, %v1365
        %v2403 = vmul.f32 %v2398, %v1369
        %v2404 = vmul.f32 %v2395, %v1365
        %v2405 = vmul.f32 %v2399, %v1369
        %v2406 = vmul.f32 %v2396, %v1365
        %v2407 = vmul.f32 %v2400, %v1369
        %v2408 = vmul.f32 %v2397, %v1365
        %v2409 = vmul.f32 %v2401, %v1369
        %s2410 = scalar_lea.vmem %s4, 64
        %v2411 = vld [vmem:[%s2410] sm:$0xff]
        %v2413 = vsel %vm1601, %v2411, 0
        %2415 = vmatprep.subr.mxu0 %v2403
        %2416 = vmatpush1.msra.mxu0 %v2402
        %2417 = vmatprep.subr.mxu0 %v2405
        %2418 = vmatpush1.msra.mxu0 %v2404
        %2419 = vmatprep.subr.mxu0 %v2407
        %2420 = vmatpush1.msra.mxu0 %v2406
        %2421 = vmatprep.subr.mxu0 %v2409
        %2422 = vmatpush1.msra.mxu0 %v2408
        %2423 = vmatprep.subr.mxu0 0.0
        %2424 = vmatpush1.msra.mxu0 0.0
        %2425 = vmatprep.subr.mxu0 0.0
        %2426 = vmatpush1.msra.mxu0 0.0
        %2427 = vmatprep.subr.mxu0 0.0
        %2428 = vmatpush1.msra.mxu0 0.0
        %2429 = vmatprep.subr.mxu0 0.0
        %2430 = vmatpush1.msra.mxu0 0.0
        %2431 = vmatprep.subr.mxu0 0.0
        %2432 = vmatpush1.msra.mxu0 0.0
        %2433 = vmatprep.subr.mxu0 0.0
        %2434 = vmatpush1.msra.mxu0 0.0
        %2435 = vmatprep.subr.mxu0 0.0
        %2436 = vmatpush1.msra.mxu0 0.0
        %2437 = vmatprep.subr.mxu0 0.0
        %2438 = vmatpush1.msra.mxu0 0.0
        %2439 = vmatprep.subr.mxu0 0.0
        %2440 = vmatpush1.msra.mxu0 0.0
        %2441 = vmatprep.subr.mxu0 0.0
        %2442 = vmatpush1.msra.mxu0 0.0
        %2443 = vmatprep.subr.mxu0 0.0
        %2444 = vmatpush1.msra.mxu0 0.0
        %2445 = vmatprep.subr.mxu0 0.0
        %2446 = vmatpush1.msra.mxu0 0.0
        %2447 = vmatprep.subr.mxu0 0.0
        %2448 = vmatpush1.msra.mxu0 0.0
        %2449 = vmatprep.subr.mxu0 0.0
        %2450 = vmatpush1.msra.mxu0 0.0
        %2451 = vmatprep.subr.mxu0 0.0
        %2452 = vmatpush1.msra.mxu0 0.0
        %2453 = vmatprep.subr.mxu0 0.0
        %2454 = vmatpush1.msra.mxu0 0.0
        %2455 = vmatprep.subr.mxu0 0.0
        %2456 = vmatpush1.msra.mxu0 0.0
        %2457 = vmatprep.subr.mxu0 0.0
        %2458 = vmatpush1.msra.mxu0 0.0
        %2459 = vmatprep.subr.mxu0 0.0
        %2460 = vmatpush1.msra.mxu0 0.0
        %2461 = vmatprep.subr.mxu0 0.0
        %2462 = vmatpush1.msra.mxu0 0.0
        %2463 = vmatprep.subr.mxu0 0.0
        %2464 = vmatpush1.msra.mxu0 0.0
        %2465 = vmatprep.subr.mxu0 0.0
        %2466 = vmatpush1.msra.mxu0 0.0
        %2467 = vmatprep.subr.mxu0 0.0
        %2468 = vmatpush1.msra.mxu0 0.0
        %2469 = vmatprep.subr.mxu0 0.0
        %2470 = vmatpush1.msra.mxu0 0.0
        %2471 = vmatprep.subr.mxu0 0.0
        %2472 = vmatpush1.msra.mxu0 0.0
        %2473 = vmatprep.subr.mxu0 0.0
        %2474 = vmatpush1.msra.mxu0 0.0
        %2475 = vmatprep.subr.mxu0 0.0
        %2476 = vmatpush1.msra.mxu0 0.0
        %2477 = vmatprep.subr.mxu0 0.0
        %2478 = vmatpush1.msra.mxu0 0.0
        %2479 = vmatprep.mubr.f32.mxu0 0.0
        %2480 = vmatmul.mubr.f32.gmra.mrb[0].mxu0 %v2413
        %v2481 = vpop.f32.mrb[0].mxu0
        %v2482 = vadd.f32 0.0, %v2481
        %v2483 = vpop.f32.mrb[0].mxu0
        %v2484 = vadd.f32 0.0, %v2483
        %2485 = vdwg.mxu0
        %v2486 = vadd.f32 %v2376, %v2482
        %v2487 = vadd.f32 %v2377, %v2484
        %v2488 = vld [vmem:[%s5] sm:$0xff]
        %2490 = vset.pattern.permute.xlu0 0
        %2491 = vperm.xlu0 %2490, %v2488
        %v2492 = vpop.permute.xlu0 %2491
        %v2494 = vadd.f32 %v2486, %v2492
        %v2495 = vadd.f32 %v2487, %v2492
        %v2496 = vmul.f32 %v2494, 0.5
        %v2497 = vmul.f32 %v2495, 0.5
        %v2498 = vtanh.pop %v2496
        %v2499 = vtanh.pop %v2497
        %v2500 = vmul.f32 %v2498, 0.5
        %v2501 = vmul.f32 %v2499, 0.5
        %v2502 = vadd.f32 %v2500, 0.5
        %v2503 = vadd.f32 %v2501, 0.5
        %2504 = vst [vmem:[%s244] sm:$0xff] %v2502
        %2505 = vst [vmem:[%s244 + $0x8] sm:$0xff] %v2503
        %s2506 = sand.u32 %s159, 1
        %s2507 = scalar_lea.sflag [#allocation3], %s2506
        %s2508 = sand.u32 %s159, 1
        %s2509 = smul.addr %s2508, 16
        %s2510 = scalar_lea.vmem [#allocation2], %s2509
        // Predicated region
        $region45: #{tpu_custom_call.1} parent=43 // pred_check
          %p2511 = pneg %p169
        $region46: #{tpu_custom_call.1} parent=43 // pred_check_branch
          %2513 = sbr.rel (%p2511) target = $region48
        $region47: #{tpu_custom_call.1} parent=43 // pred_region
          %s2515 = ssub.s32 256, 256
          %2516 = vsyncadd %s2507, %s2515
          %s2517 = smul.addr %s20, 2
          %s2518 = smul.addr %s2517, 128
          %s2519 = scalar_lea.hbm %s6, %s2518
          %s2521 = sshll.u32 %s2510, 4
          %s2522 = int_to_ptr.vmem [resolvable:$true] %s2521
          %2524 = dma.vmem_to_hbm [thread:$0]  %s2522, 256, %s2519, %s2507
        $region48: #{tpu_custom_call.1} parent=43 // pred_fallthru
          _
      $region44: #{tpu_custom_call.1} parent=5 // pred_fallthru
        _
      %p2525 = scmp.le.s32.totalorder 2, %s15
      // Predicated region
      $region49: #{tpu_custom_call.1} parent=5 // pred_check
        %p2526 = pneg %p2525
      $region50: #{tpu_custom_call.1} parent=5 // pred_check_branch
        %2528 = sbr.rel (%p2526) target = $region52
      $region51: #{tpu_custom_call.1} parent=5 // pred_region
        %s2529 = ssub.s32 %s15, 2
        // Predicated region
        $region53: #{tpu_custom_call.1} parent=51 // pred_check
          %p2530 = pneg %p175
        $region54: #{tpu_custom_call.1} parent=51 // pred_check_branch
          %2532 = sbr.rel (%p2530) target = $region56
        $region55: #{tpu_custom_call.1} parent=51 // pred_region
          %s2533 = sand.u32 %s160, 1
          %s2534 = scalar_lea.sflag [#allocation3], %s2533
          %s2535 = sand.u32 %s160, 1
          %s2536 = smul.addr %s2535, 16
          %s2537 = scalar_lea.vmem [#allocation2], %s2536
          %2538 = dma.done %s2534, 256
        $region56: #{tpu_custom_call.1} parent=51 // pred_fallthru
          _
      $region52: #{tpu_custom_call.1} parent=5 // pred_fallthru
        _
    $region6: #{tpu_custom_call.1} parent=1 // loop_footer
      %s19 = sadd.s32 1, %s15
    $region7: #{tpu_custom_call.1} parent=1 // loop_footer_branch
      %14 = sbr.rel target = $region3
    $region8: #{tpu_custom_call.1} parent=1 // loop_exit
      _
    %2539 = vsyncpa [#allocation3], 1
    %s2540 = scalar_lea.sflag [#allocation3], 1
    %2541 = vsyncpa %s2540, 1

</llo_original>
